<compile_context>
chip_gen: v5e
topology: v5e:2x2
jax: 0.10.0
libtpu: 0.0.40
codegen_flags: <defaults>
</compile_context>

<pallas_src>
import functools

import jax
import jax.numpy as jnp
import numpy as np
from jax.experimental import pallas as pl
from jax.experimental.pallas import tpu as pltpu

# ----- "config" values (the module reads them from a config object) -----
FEATURE_DIM = 7
GAT_INPUT_DIM = FEATURE_DIM + 1          # 8
GAT_HIDDEN_DIM = 32
GAT_ATTENTION_HEADS = 4
GAT_LAYERS = 3
DROPOUT_RATE = 0.1                       # identity at inference


# --------------------------- fused Pallas kernel ---------------------------

def _critic_fused_kernel(*refs, layer_meta):
    """One grid step = one graph-batch: GATConv x3 -> global_mean_pool -> Linear(., 1).

    refs = [x, adj, pool, (w, a_proj_w, bias) * L, value_w, value_b, out]
    layer_meta = ((heads, out_ch, apply_elu), ...)  -- static.
    """
    x_ref, adj_ref, pool_ref = refs[0], refs[1], refs[2]
    vw_ref, vb_ref, out_ref = refs[-3], refs[-2], refs[-1]
    lrefs = refs[3:-3]

    n = x_ref.shape[1]
    h = x_ref[0].astype(jnp.float32)                                  # [N, Fin]
    # Single [N, N] adjacency (not H-tiled); additive mask built once per grid step.
    adj_bias = jnp.where(adj_ref[0] > 0.0, 0.0, -1e30).astype(jnp.float32)
    ones_col = jnp.ones((n, 1), jnp.float32)

    for li, (heads, c, apply_elu) in enumerate(layer_meta):
        w_ref, a_ref, b_ref = lrefs[3 * li], lrefs[3 * li + 1], lrefs[3 * li + 2]

        xb = h.astype(jnp.bfloat16)
        # Per-head node features, lane-concatenated: [N, H*C]   (bf16 MXU, f32 acc).
        feat = jnp.dot(xb, w_ref[...], preferred_element_type=jnp.float32)
        # Folded attention projections, kept f32 for parity: [N, 2H] = [a_dst | a_src].
        a_proj = jnp.dot(h, a_ref[...], preferred_element_type=jnp.float32)

        head_outs = []
        for hd in range(heads):
            a_dst_col = a_proj[:, hd:hd + 1]                          # [N, 1]
            a_src_col = a_proj[:, heads + hd:heads + hd + 1]          # [N, 1]
            # Logits s[i, j] = a_dst[i] + a_src[j] in ONE contract-last-dims matmul
            # (same MXU pattern as q @ k^T) -- no transpose / axis-0 reduce needed.
            u = jnp.concatenate([a_dst_col, ones_col], axis=-1)       # [N, 2]
            v = jnp.concatenate([ones_col, a_src_col], axis=-1)       # [N, 2]
            s = jnp.einsum("ie,je->ij", u, v,
                           preferred_element_type=jnp.float32)        # [N, N]
            s = jnp.where(s >= 0.0, s, 0.2 * s)                       # LeakyReLU(0.2)
            s = s + adj_bias                                          # 0 on-edge, -1e30 off
            # Per-head, per-row softmax over source nodes; self-loops guarantee the
            # row max comes from an un-masked lane, so masked lanes underflow to 0
            # and the denominator is >= 1 (no clamp needed).
            m = jnp.max(s, axis=-1, keepdims=True)
            e = jnp.exp(s - m)
            denom = jnp.sum(e, axis=-1, keepdims=True)
            p = e * pl.reciprocal(denom, approx=False)                # exact recip (parity)
            f_h = feat[:, hd * c:(hd + 1) * c]                        # [N, C] lane slice
            head_outs.append(jnp.dot(p.astype(jnp.bfloat16), f_h.astype(jnp.bfloat16),
                                     preferred_element_type=jnp.float32))
        # concat=True is lane-concatenation; last layer has heads=1 so PyG's
        # mean-over-heads (concat=False) is the identity.
        out = head_outs[0] if heads == 1 else jnp.concatenate(head_outs, axis=-1)
        out = out + b_ref[...]
        if apply_elu:
            out = jnp.where(out > 0.0, out, jnp.exp(jnp.minimum(out, 0.0)) - 1.0)  # ELU
        h = out

    # global_mean_pool (row-normalized pooling matrix) + value head (tiny, kept f32).
    emb = jnp.dot(pool_ref[0], h, preferred_element_type=jnp.float32)             # [G, C]
    val = jnp.dot(emb, vw_ref[...], preferred_element_type=jnp.float32) + vb_ref[...]
    out_ref[0] = val.astype(out_ref.dtype)


# --------------------------- wrapper (host folding done ONCE, jitted) ---------------------------

def make_critic_forward(params):
    """Folds attention params on the host once and returns a jitted forward function.

    forward(x, adj, pool):
      x    [B, N, Fin]  node features per graph-batch
      adj  [B, N, N]    dense adjacency, adj[b, dst, src] = 1.0 (self-loops included)
      pool [B, G, N]    row-normalized global_mean_pool matrix (G graphs per batch)
      -> value [B*G, 1]
    """
    n_layers = len(params["gat"])
    layer_params = []
    layer_meta = []
    for i, layer in enumerate(params["gat"]):
        heads, c = int(layer["heads"]), int(layer["out_ch"])
        fin = layer["w"].shape[0]
        w3 = layer["w"].reshape(fin, heads, c)
        # a_dst[n, h] = <feat[n, h, :], att_dst[h, :]> = x[n, :] @ (W folded with att_dst)
        a_dst_w = jnp.einsum("fhc,hc->fh", w3, layer["att_dst"])      # [Fin, H]
        a_src_w = jnp.einsum("fhc,hc->fh", w3, layer["att_src"])      # [Fin, H]
        a_w = jnp.concatenate([a_dst_w, a_src_w], axis=-1).astype(jnp.float32)   # [Fin, 2H]
        layer_params.append((layer["w"].astype(jnp.bfloat16), a_w,
                             layer["bias"].astype(jnp.float32)))
        layer_meta.append((heads, c, i < n_layers - 1))
    layer_meta = tuple(layer_meta)
    value_w = params["value_w"].astype(jnp.float32)
    value_b = params["value_b"].astype(jnp.float32)
    kernel = functools.partial(_critic_fused_kernel, layer_meta=layer_meta)

    @jax.jit
    def forward(x, adj, pool):
        b, n, fin = x.shape
        g = pool.shape[1]

        args = [x.astype(jnp.float32), adj.astype(jnp.float32), pool.astype(jnp.float32)]
        in_specs = [pl.BlockSpec((1, n, fin), lambda i: (i, 0, 0)),
                    pl.BlockSpec((1, n, n), lambda i: (i, 0, 0)),
                    pl.BlockSpec((1, g, n), lambda i: (i, 0, 0))]
        for (w, a_w, bias) in layer_params:
            args += [w, a_w, bias]
            in_specs += [pl.BlockSpec(w.shape, lambda i: (0, 0)),
                         pl.BlockSpec(a_w.shape, lambda i: (0, 0)),
                         pl.BlockSpec(bias.shape, lambda i: (0, 0))]
        args += [value_w, value_b]
        in_specs += [pl.BlockSpec(value_w.shape, lambda i: (0, 0)),
                     pl.BlockSpec(value_b.shape, lambda i: (0, 0))]

        # ---- advisory cost estimate ----
        flops, trans = 0, 0
        for (heads, c, _), (w, _, _) in zip(layer_meta, layer_params):
            fin_l, hc = w.shape
            flops += 2 * n * fin_l * hc + 4 * n * fin_l * heads        # feat + attn proj
            flops += heads * (2 * n * n * c + 12 * n * n)              # aggregation + softmax
            trans += heads * n * n + n * hc                            # exp (softmax, ELU)
        c_last = layer_meta[-1][1]
        flops += 2 * g * n * c_last + 2 * g * c_last
        flops, trans = flops * b, trans * b
        bytes_accessed = sum(int(a.size) * a.dtype.itemsize for a in args) + b * g * 4

        out = pl.pallas_call(
            kernel,
            grid=(b,),
            out_shape=jax.ShapeDtypeStruct((b, g, 1), jnp.float32),
            in_specs=in_specs,
            out_specs=pl.BlockSpec((1, g, 1), lambda i: (i, 0, 0)),
            compiler_params=pltpu.CompilerParams(
                dimension_semantics=("parallel",)),     # v7x: batches split across 2 TCs
            cost_estimate=pl.CostEstimate(flops=int(flops), transcendentals=int(trans),
                                          bytes_accessed=int(bytes_accessed)),
        )(*args)
        return out.reshape(b * g, 1)                    # [num_graphs_total, 1]

    return forward


# --------------------------- deterministic params / data ---------------------------

def init_params(key):
    layer_cfgs = [
        # (in_dim, out_ch, heads, concat)
        (GAT_INPUT_DIM, GAT_HIDDEN_DIM, GAT_ATTENTION_HEADS, True),
        (GAT_HIDDEN_DIM * GAT_ATTENTION_HEADS, GAT_HIDDEN_DIM, GAT_ATTENTION_HEADS, True),
        (GAT_HIDDEN_DIM * GAT_ATTENTION_HEADS, GAT_HIDDEN_DIM, 1, False),
    ]
    gat_layers = []
    for (fin, c, h, concat) in layer_cfgs:
        key, k1, k2, k3 = jax.random.split(key, 4)
        w = jax.random.normal(k1, (fin, h * c), jnp.float32) * (1.0 / np.sqrt(fin))
        att_src = jax.random.normal(k2, (h, c), jnp.float32) * 0.1
        att_dst = jax.random.normal(k3, (h, c), jnp.float32) * 0.1
        bias = jnp.zeros((1, h * c if concat else c), jnp.float32)
        gat_layers.append(dict(w=w, att_src=att_src, att_dst=att_dst, bias=bias,
                               heads=h, out_ch=c, concat=concat))
    key, kv = jax.random.split(key)
    value_w = jax.random.normal(kv, (GAT_HIDDEN_DIM, 1), jnp.float32) * (1.0 / np.sqrt(GAT_HIDDEN_DIM))
    value_b = jnp.zeros((1, 1), jnp.float32)
    return dict(gat=gat_layers, value_w=value_w, value_b=value_b)


def build_graph_batches(key, num_batches=2, graphs_per_batch=2, nodes_per_graph=8):
    """Independent PyG-style graph batches: x [B,N,F], dense adj [B,N,N], pool [B,G,N]."""
    n = graphs_per_batch * nodes_per_graph
    x = jax.random.normal(key, (num_batches, n, GAT_INPUT_DIM), jnp.float32)

    adj = np.zeros((n, n), np.float32)                    # adj[dst, src]
    for g in range(graphs_per_batch):
        base = g * nodes_per_graph
        for i in range(nodes_per_graph):
            for step in (1, 2):                           # DAG edges i -> i+1, i -> i+2
                j = i + step
                if j < nodes_per_graph:
                    adj[base + j, base + i] = 1.0
    np.fill_diagonal(adj, 1.0)                            # add_self_loops=True

    pool = np.zeros((graphs_per_batch, n), np.float32)    # global_mean_pool matrix
    for g in range(graphs_per_batch):
        pool[g, g * nodes_per_graph:(g + 1) * nodes_per_graph] = 1.0 / nodes_per_graph

    adj_b = jnp.tile(jnp.asarray(adj)[None], (num_batches, 1, 1))
    pool_b = jnp.tile(jnp.asarray(pool)[None], (num_batches, 1, 1))
    return x, adj_b, pool_b


if __name__ == "__main__":
    root = jax.random.PRNGKey(0)
    k_params, k_data = jax.random.split(root)

    params = init_params(k_params)
    critic_forward = make_critic_forward(params)

    x, adj, pool = build_graph_batches(k_data, num_batches=2, graphs_per_batch=2,
                                       nodes_per_graph=8)
    value = critic_forward(x, adj, pool)
    value = jax.block_until_ready(value)

    assert value.shape == (4, 1) and value.dtype == jnp.float32
    assert bool(jnp.all(jnp.isfinite(value)))
    print("KERNEL_OK")
</pallas_src>

<mosaic_0001>
module attributes {stable_mosaic.version = 11 : i64} {
  func.func @_critic_fused_kernel(%arg0: i32, %arg1: memref<1x16x8xf32, #tpu.memory_space<vmem>>, %arg2: memref<1x16x16xf32, #tpu.memory_space<vmem>>, %arg3: memref<1x2x16xf32, #tpu.memory_space<vmem>>, %arg4: memref<8x128xbf16, #tpu.memory_space<vmem>>, %arg5: memref<8x8xf32, #tpu.memory_space<vmem>>, %arg6: memref<1x128xf32, #tpu.memory_space<vmem>>, %arg7: memref<128x128xbf16, #tpu.memory_space<vmem>>, %arg8: memref<128x8xf32, #tpu.memory_space<vmem>>, %arg9: memref<1x128xf32, #tpu.memory_space<vmem>>, %arg10: memref<128x32xbf16, #tpu.memory_space<vmem>>, %arg11: memref<128x2xf32, #tpu.memory_space<vmem>>, %arg12: memref<1x32xf32, #tpu.memory_space<vmem>>, %arg13: memref<32x1xf32, #tpu.memory_space<vmem>>, %arg14: memref<1x1xf32, #tpu.memory_space<vmem>>, %arg15: memref<1x2x1xf32, #tpu.memory_space<vmem>>) attributes {dimension_semantics = [#tpu.dimension_semantics<parallel>], iteration_bounds = array<i64: 2>, scalar_prefetch = 0 : i64, scratch_operands = 0 : i64, tpu.core_type = #tpu.core_type<tc>, window_params = [{transform_indices = @transform_0, window_bounds = array<i64: 1, 16, 8>}, {transform_indices = @transform_1, window_bounds = array<i64: 1, 16, 16>}, {transform_indices = @transform_2, window_bounds = array<i64: 1, 2, 16>}, {pipeline_mode = #tpu.pipeline_mode<synchronous>, transform_indices = @transform_3, window_bounds = array<i64: 8, 128>}, {pipeline_mode = #tpu.pipeline_mode<synchronous>, transform_indices = @transform_4, window_bounds = array<i64: 8, 8>}, {pipeline_mode = #tpu.pipeline_mode<synchronous>, transform_indices = @transform_5, window_bounds = array<i64: 1, 128>}, {pipeline_mode = #tpu.pipeline_mode<synchronous>, transform_indices = @transform_6, window_bounds = array<i64: 128, 128>}, {pipeline_mode = #tpu.pipeline_mode<synchronous>, transform_indices = @transform_7, window_bounds = array<i64: 128, 8>}, {pipeline_mode = #tpu.pipeline_mode<synchronous>, transform_indices = @transform_8, window_bounds = array<i64: 1, 128>}, {pipeline_mode = #tpu.pipeline_mode<synchronous>, transform_indices = @transform_9, window_bounds = array<i64: 128, 32>}, {pipeline_mode = #tpu.pipeline_mode<synchronous>, transform_indices = @transform_10, window_bounds = array<i64: 128, 2>}, {pipeline_mode = #tpu.pipeline_mode<synchronous>, transform_indices = @transform_11, window_bounds = array<i64: 1, 32>}, {pipeline_mode = #tpu.pipeline_mode<synchronous>, transform_indices = @transform_12, window_bounds = array<i64: 32, 1>}, {pipeline_mode = #tpu.pipeline_mode<synchronous>, transform_indices = @transform_13, window_bounds = array<i64: 1, 1>}, {transform_indices = @transform_14, window_bounds = array<i64: 1, 2, 1>}]} {
    %c0 = arith.constant 0 : index
    %c0_0 = arith.constant 0 : index
    %c0_1 = arith.constant 0 : index
    %0 = vector.load %arg1[%c0, %c0_0, %c0_1] : memref<1x16x8xf32, #tpu.memory_space<vmem>>, vector<1x16x8xf32>
    %1 = vector.shape_cast %0 : vector<1x16x8xf32> to vector<16x8xf32>
    %c0_2 = arith.constant 0 : index
    %c0_3 = arith.constant 0 : index
    %c0_4 = arith.constant 0 : index
    %2 = vector.load %arg2[%c0_2, %c0_3, %c0_4] : memref<1x16x16xf32, #tpu.memory_space<vmem>>, vector<1x16x16xf32>
    %3 = vector.shape_cast %2 : vector<1x16x16xf32> to vector<16x16xf32>
    %cst = arith.constant 0.000000e+00 : f32
    %4 = vector.broadcast %cst : f32 to vector<16x16xf32>
    %5 = arith.cmpf ogt, %3, %4 : vector<16x16xf32>
    %cst_5 = arith.constant 0.000000e+00 : f32
    %cst_6 = arith.constant -1.000000e+30 : f32
    %6 = vector.broadcast %cst_5 : f32 to vector<16x16xf32>
    %7 = vector.broadcast %cst_6 : f32 to vector<16x16xf32>
    %8 = arith.select %5, %6, %7 : vector<16x16xi1>, vector<16x16xf32>
    %cst_7 = arith.constant 1.000000e+00 : f32
    %9 = vector.broadcast %cst_7 : f32 to vector<16x1xf32>
    %10 = arith.truncf %1 : vector<16x8xf32> to vector<16x8xbf16>
    %c0_8 = arith.constant 0 : index
    %c0_9 = arith.constant 0 : index
    %11 = vector.load %arg4[%c0_8, %c0_9] : memref<8x128xbf16, #tpu.memory_space<vmem>>, vector<8x128xbf16>
    %cst_10 = arith.constant dense<0.000000e+00> : vector<16x128xf32>
    %12 = tpu.matmul %10, %11, %cst_10 {dimension_numbers = #tpu.dot_dimension_numbers<[1], [0], [0], [1], [0, 0, 1, 1], [], []>} : vector<16x8xbf16>, vector<8x128xbf16>, vector<16x128xf32> -> vector<16x128xf32>
    %c0_11 = arith.constant 0 : index
    %c0_12 = arith.constant 0 : index
    %13 = vector.load %arg5[%c0_11, %c0_12] : memref<8x8xf32, #tpu.memory_space<vmem>>, vector<8x8xf32>
    %cst_13 = arith.constant dense<0.000000e+00> : vector<16x8xf32>
    %14 = tpu.matmul %1, %13, %cst_13 {dimension_numbers = #tpu.dot_dimension_numbers<[1], [0], [0], [1], [0, 0, 1, 1], [], []>} : vector<16x8xf32>, vector<8x8xf32>, vector<16x8xf32> -> vector<16x8xf32>
    %15 = vector.extract_strided_slice %14 {offsets = [0, 0], sizes = [16, 1], strides = [1, 1]} : vector<16x8xf32> to vector<16x1xf32>
    %16 = vector.extract_strided_slice %14 {offsets = [0, 4], sizes = [16, 1], strides = [1, 1]} : vector<16x8xf32> to vector<16x1xf32>
    %17 = tpu.concatenate %15, %9 in 1 : vector<16x1xf32>, vector<16x1xf32> -> vector<16x2xf32>
    %18 = tpu.concatenate %9, %16 in 1 : vector<16x1xf32>, vector<16x1xf32> -> vector<16x2xf32>
    "tpu.trace_start"() <{level = 10 : i32, message = "ie,je->ij"}> : () -> ()
    %cst_14 = arith.constant dense<0.000000e+00> : vector<16x16xf32>
    %19 = tpu.matmul %17, %18, %cst_14 {dimension_numbers = #tpu.dot_dimension_numbers<[1], [1], [0], [0], [0, 0, 1, 0], [], []>} : vector<16x2xf32>, vector<16x2xf32>, vector<16x16xf32> -> vector<16x16xf32>
    %cst_15 = arith.constant 0.000000e+00 : f32
    "tpu.trace_stop"() : () -> ()
    %20 = vector.broadcast %cst_15 : f32 to vector<16x16xf32>
    %21 = arith.cmpf oge, %19, %20 : vector<16x16xf32>
    %cst_16 = arith.constant 2.000000e-01 : f32
    %22 = vector.broadcast %cst_16 : f32 to vector<16x16xf32>
    %23 = arith.mulf %22, %19 : vector<16x16xf32>
    %24 = arith.select %21, %19, %23 : vector<16x16xi1>, vector<16x16xf32>
    %25 = arith.addf %24, %8 : vector<16x16xf32>
    %cst_17 = arith.constant dense<0xFF800000> : vector<16xf32>
    %26 = vector.multi_reduction <maximumf>, %25, %cst_17 [1] : vector<16x16xf32> to vector<16xf32>
    %27 = vector.shape_cast %26 : vector<16xf32> to vector<16x1xf32>
    %28 = vector.broadcast %27 : vector<16x1xf32> to vector<16x16xf32>
    %29 = arith.subf %25, %28 : vector<16x16xf32>
    %30 = math.exp %29 : vector<16x16xf32>
    %cst_18 = arith.constant dense<0.000000e+00> : vector<16xf32>
    %31 = vector.multi_reduction <add>, %30, %cst_18 [1] : vector<16x16xf32> to vector<16xf32>
    %32 = vector.shape_cast %31 : vector<16xf32> to vector<16x1xf32>
    %33 = tpu.reciprocal %32 : vector<16x1xf32> -> vector<16x1xf32>
    %34 = vector.broadcast %33 : vector<16x1xf32> to vector<16x16xf32>
    %35 = arith.mulf %30, %34 : vector<16x16xf32>
    %36 = vector.extract_strided_slice %12 {offsets = [0, 0], sizes = [16, 32], strides = [1, 1]} : vector<16x128xf32> to vector<16x32xf32>
    %37 = arith.truncf %35 : vector<16x16xf32> to vector<16x16xbf16>
    %38 = arith.truncf %36 : vector<16x32xf32> to vector<16x32xbf16>
    %cst_19 = arith.constant dense<0.000000e+00> : vector<16x32xf32>
    %39 = tpu.matmul %37, %38, %cst_19 {dimension_numbers = #tpu.dot_dimension_numbers<[1], [0], [0], [1], [0, 0, 1, 1], [], []>} : vector<16x16xbf16>, vector<16x32xbf16>, vector<16x32xf32> -> vector<16x32xf32>
    %40 = vector.extract_strided_slice %14 {offsets = [0, 1], sizes = [16, 1], strides = [1, 1]} : vector<16x8xf32> to vector<16x1xf32>
    %41 = vector.extract_strided_slice %14 {offsets = [0, 5], sizes = [16, 1], strides = [1, 1]} : vector<16x8xf32> to vector<16x1xf32>
    %42 = tpu.concatenate %40, %9 in 1 : vector<16x1xf32>, vector<16x1xf32> -> vector<16x2xf32>
    %43 = tpu.concatenate %9, %41 in 1 : vector<16x1xf32>, vector<16x1xf32> -> vector<16x2xf32>
    "tpu.trace_start"() <{level = 10 : i32, message = "ie,je->ij"}> : () -> ()
    %cst_20 = arith.constant dense<0.000000e+00> : vector<16x16xf32>
    %44 = tpu.matmul %42, %43, %cst_20 {dimension_numbers = #tpu.dot_dimension_numbers<[1], [1], [0], [0], [0, 0, 1, 0], [], []>} : vector<16x2xf32>, vector<16x2xf32>, vector<16x16xf32> -> vector<16x16xf32>
    %cst_21 = arith.constant 0.000000e+00 : f32
    "tpu.trace_stop"() : () -> ()
    %45 = vector.broadcast %cst_21 : f32 to vector<16x16xf32>
    %46 = arith.cmpf oge, %44, %45 : vector<16x16xf32>
    %cst_22 = arith.constant 2.000000e-01 : f32
    %47 = vector.broadcast %cst_22 : f32 to vector<16x16xf32>
    %48 = arith.mulf %47, %44 : vector<16x16xf32>
    %49 = arith.select %46, %44, %48 : vector<16x16xi1>, vector<16x16xf32>
    %50 = arith.addf %49, %8 : vector<16x16xf32>
    %cst_23 = arith.constant dense<0xFF800000> : vector<16xf32>
    %51 = vector.multi_reduction <maximumf>, %50, %cst_23 [1] : vector<16x16xf32> to vector<16xf32>
    %52 = vector.shape_cast %51 : vector<16xf32> to vector<16x1xf32>
    %53 = vector.broadcast %52 : vector<16x1xf32> to vector<16x16xf32>
    %54 = arith.subf %50, %53 : vector<16x16xf32>
    %55 = math.exp %54 : vector<16x16xf32>
    %cst_24 = arith.constant dense<0.000000e+00> : vector<16xf32>
    %56 = vector.multi_reduction <add>, %55, %cst_24 [1] : vector<16x16xf32> to vector<16xf32>
    %57 = vector.shape_cast %56 : vector<16xf32> to vector<16x1xf32>
    %58 = tpu.reciprocal %57 : vector<16x1xf32> -> vector<16x1xf32>
    %59 = vector.broadcast %58 : vector<16x1xf32> to vector<16x16xf32>
    %60 = arith.mulf %55, %59 : vector<16x16xf32>
    %61 = vector.extract_strided_slice %12 {offsets = [0, 32], sizes = [16, 32], strides = [1, 1]} : vector<16x128xf32> to vector<16x32xf32>
    %62 = arith.truncf %60 : vector<16x16xf32> to vector<16x16xbf16>
    %63 = arith.truncf %61 : vector<16x32xf32> to vector<16x32xbf16>
    %cst_25 = arith.constant dense<0.000000e+00> : vector<16x32xf32>
    %64 = tpu.matmul %62, %63, %cst_25 {dimension_numbers = #tpu.dot_dimension_numbers<[1], [0], [0], [1], [0, 0, 1, 1], [], []>} : vector<16x16xbf16>, vector<16x32xbf16>, vector<16x32xf32> -> vector<16x32xf32>
    %65 = vector.extract_strided_slice %14 {offsets = [0, 2], sizes = [16, 1], strides = [1, 1]} : vector<16x8xf32> to vector<16x1xf32>
    %66 = vector.extract_strided_slice %14 {offsets = [0, 6], sizes = [16, 1], strides = [1, 1]} : vector<16x8xf32> to vector<16x1xf32>
    %67 = tpu.concatenate %65, %9 in 1 : vector<16x1xf32>, vector<16x1xf32> -> vector<16x2xf32>
    %68 = tpu.concatenate %9, %66 in 1 : vector<16x1xf32>, vector<16x1xf32> -> vector<16x2xf32>
    "tpu.trace_start"() <{level = 10 : i32, message = "ie,je->ij"}> : () -> ()
    %cst_26 = arith.constant dense<0.000000e+00> : vector<16x16xf32>
    %69 = tpu.matmul %67, %68, %cst_26 {dimension_numbers = #tpu.dot_dimension_numbers<[1], [1], [0], [0], [0, 0, 1, 0], [], []>} : vector<16x2xf32>, vector<16x2xf32>, vector<16x16xf32> -> vector<16x16xf32>
    %cst_27 = arith.constant 0.000000e+00 : f32
    "tpu.trace_stop"() : () -> ()
    %70 = vector.broadcast %cst_27 : f32 to vector<16x16xf32>
    %71 = arith.cmpf oge, %69, %70 : vector<16x16xf32>
    %cst_28 = arith.constant 2.000000e-01 : f32
    %72 = vector.broadcast %cst_28 : f32 to vector<16x16xf32>
    %73 = arith.mulf %72, %69 : vector<16x16xf32>
    %74 = arith.select %71, %69, %73 : vector<16x16xi1>, vector<16x16xf32>
    %75 = arith.addf %74, %8 : vector<16x16xf32>
    %cst_29 = arith.constant dense<0xFF800000> : vector<16xf32>
    %76 = vector.multi_reduction <maximumf>, %75, %cst_29 [1] : vector<16x16xf32> to vector<16xf32>
    %77 = vector.shape_cast %76 : vector<16xf32> to vector<16x1xf32>
    %78 = vector.broadcast %77 : vector<16x1xf32> to vector<16x16xf32>
    %79 = arith.subf %75, %78 : vector<16x16xf32>
    %80 = math.exp %79 : vector<16x16xf32>
    %cst_30 = arith.constant dense<0.000000e+00> : vector<16xf32>
    %81 = vector.multi_reduction <add>, %80, %cst_30 [1] : vector<16x16xf32> to vector<16xf32>
    %82 = vector.shape_cast %81 : vector<16xf32> to vector<16x1xf32>
    %83 = tpu.reciprocal %82 : vector<16x1xf32> -> vector<16x1xf32>
    %84 = vector.broadcast %83 : vector<16x1xf32> to vector<16x16xf32>
    %85 = arith.mulf %80, %84 : vector<16x16xf32>
    %86 = vector.extract_strided_slice %12 {offsets = [0, 64], sizes = [16, 32], strides = [1, 1]} : vector<16x128xf32> to vector<16x32xf32>
    %87 = arith.truncf %85 : vector<16x16xf32> to vector<16x16xbf16>
    %88 = arith.truncf %86 : vector<16x32xf32> to vector<16x32xbf16>
    %cst_31 = arith.constant dense<0.000000e+00> : vector<16x32xf32>
    %89 = tpu.matmul %87, %88, %cst_31 {dimension_numbers = #tpu.dot_dimension_numbers<[1], [0], [0], [1], [0, 0, 1, 1], [], []>} : vector<16x16xbf16>, vector<16x32xbf16>, vector<16x32xf32> -> vector<16x32xf32>
    %90 = vector.extract_strided_slice %14 {offsets = [0, 3], sizes = [16, 1], strides = [1, 1]} : vector<16x8xf32> to vector<16x1xf32>
    %91 = vector.extract_strided_slice %14 {offsets = [0, 7], sizes = [16, 1], strides = [1, 1]} : vector<16x8xf32> to vector<16x1xf32>
    %92 = tpu.concatenate %90, %9 in 1 : vector<16x1xf32>, vector<16x1xf32> -> vector<16x2xf32>
    %93 = tpu.concatenate %9, %91 in 1 : vector<16x1xf32>, vector<16x1xf32> -> vector<16x2xf32>
    "tpu.trace_start"() <{level = 10 : i32, message = "ie,je->ij"}> : () -> ()
    %cst_32 = arith.constant dense<0.000000e+00> : vector<16x16xf32>
    %94 = tpu.matmul %92, %93, %cst_32 {dimension_numbers = #tpu.dot_dimension_numbers<[1], [1], [0], [0], [0, 0, 1, 0], [], []>} : vector<16x2xf32>, vector<16x2xf32>, vector<16x16xf32> -> vector<16x16xf32>
    %cst_33 = arith.constant 0.000000e+00 : f32
    "tpu.trace_stop"() : () -> ()
    %95 = vector.broadcast %cst_33 : f32 to vector<16x16xf32>
    %96 = arith.cmpf oge, %94, %95 : vector<16x16xf32>
    %cst_34 = arith.constant 2.000000e-01 : f32
    %97 = vector.broadcast %cst_34 : f32 to vector<16x16xf32>
    %98 = arith.mulf %97, %94 : vector<16x16xf32>
    %99 = arith.select %96, %94, %98 : vector<16x16xi1>, vector<16x16xf32>
    %100 = arith.addf %99, %8 : vector<16x16xf32>
    %cst_35 = arith.constant dense<0xFF800000> : vector<16xf32>
    %101 = vector.multi_reduction <maximumf>, %100, %cst_35 [1] : vector<16x16xf32> to vector<16xf32>
    %102 = vector.shape_cast %101 : vector<16xf32> to vector<16x1xf32>
    %103 = vector.broadcast %102 : vector<16x1xf32> to vector<16x16xf32>
    %104 = arith.subf %100, %103 : vector<16x16xf32>
    %105 = math.exp %104 : vector<16x16xf32>
    %cst_36 = arith.constant dense<0.000000e+00> : vector<16xf32>
    %106 = vector.multi_reduction <add>, %105, %cst_36 [1] : vector<16x16xf32> to vector<16xf32>
    %107 = vector.shape_cast %106 : vector<16xf32> to vector<16x1xf32>
    %108 = tpu.reciprocal %107 : vector<16x1xf32> -> vector<16x1xf32>
    %109 = vector.broadcast %108 : vector<16x1xf32> to vector<16x16xf32>
    %110 = arith.mulf %105, %109 : vector<16x16xf32>
    %111 = vector.extract_strided_slice %12 {offsets = [0, 96], sizes = [16, 32], strides = [1, 1]} : vector<16x128xf32> to vector<16x32xf32>
    %112 = arith.truncf %110 : vector<16x16xf32> to vector<16x16xbf16>
    %113 = arith.truncf %111 : vector<16x32xf32> to vector<16x32xbf16>
    %cst_37 = arith.constant dense<0.000000e+00> : vector<16x32xf32>
    %114 = tpu.matmul %112, %113, %cst_37 {dimension_numbers = #tpu.dot_dimension_numbers<[1], [0], [0], [1], [0, 0, 1, 1], [], []>} : vector<16x16xbf16>, vector<16x32xbf16>, vector<16x32xf32> -> vector<16x32xf32>
    %115 = tpu.concatenate %39, %64, %89, %114 in 1 : vector<16x32xf32>, vector<16x32xf32>, vector<16x32xf32>, vector<16x32xf32> -> vector<16x128xf32>
    %c0_38 = arith.constant 0 : index
    %c0_39 = arith.constant 0 : index
    %116 = vector.load %arg6[%c0_38, %c0_39] : memref<1x128xf32, #tpu.memory_space<vmem>>, vector<1x128xf32>
    %117 = vector.broadcast %116 : vector<1x128xf32> to vector<16x128xf32>
    %118 = arith.addf %115, %117 : vector<16x128xf32>
    %cst_40 = arith.constant 0.000000e+00 : f32
    %119 = vector.broadcast %cst_40 : f32 to vector<16x128xf32>
    %120 = arith.cmpf ogt, %118, %119 : vector<16x128xf32>
    %cst_41 = arith.constant 0.000000e+00 : f32
    %121 = vector.broadcast %cst_41 : f32 to vector<16x128xf32>
    %122 = arith.minimumf %118, %121 : vector<16x128xf32>
    %123 = math.exp %122 : vector<16x128xf32>
    %cst_42 = arith.constant 1.000000e+00 : f32
    %124 = vector.broadcast %cst_42 : f32 to vector<16x128xf32>
    %125 = arith.subf %123, %124 : vector<16x128xf32>
    %126 = arith.select %120, %118, %125 : vector<16x128xi1>, vector<16x128xf32>
    %127 = arith.truncf %126 : vector<16x128xf32> to vector<16x128xbf16>
    %c0_43 = arith.constant 0 : index
    %c0_44 = arith.constant 0 : index
    %128 = vector.load %arg7[%c0_43, %c0_44] : memref<128x128xbf16, #tpu.memory_space<vmem>>, vector<128x128xbf16>
    %cst_45 = arith.constant dense<0.000000e+00> : vector<16x128xf32>
    %129 = tpu.matmul %127, %128, %cst_45 {dimension_numbers = #tpu.dot_dimension_numbers<[1], [0], [0], [1], [0, 0, 1, 1], [], []>} : vector<16x128xbf16>, vector<128x128xbf16>, vector<16x128xf32> -> vector<16x128xf32>
    %c0_46 = arith.constant 0 : index
    %c0_47 = arith.constant 0 : index
    %130 = vector.load %arg8[%c0_46, %c0_47] : memref<128x8xf32, #tpu.memory_space<vmem>>, vector<128x8xf32>
    %cst_48 = arith.constant dense<0.000000e+00> : vector<16x8xf32>
    %131 = tpu.matmul %126, %130, %cst_48 {dimension_numbers = #tpu.dot_dimension_numbers<[1], [0], [0], [1], [0, 0, 1, 1], [], []>} : vector<16x128xf32>, vector<128x8xf32>, vector<16x8xf32> -> vector<16x8xf32>
    %132 = vector.extract_strided_slice %131 {offsets = [0, 0], sizes = [16, 1], strides = [1, 1]} : vector<16x8xf32> to vector<16x1xf32>
    %133 = vector.extract_strided_slice %131 {offsets = [0, 4], sizes = [16, 1], strides = [1, 1]} : vector<16x8xf32> to vector<16x1xf32>
    %134 = tpu.concatenate %132, %9 in 1 : vector<16x1xf32>, vector<16x1xf32> -> vector<16x2xf32>
    %135 = tpu.concatenate %9, %133 in 1 : vector<16x1xf32>, vector<16x1xf32> -> vector<16x2xf32>
    "tpu.trace_start"() <{level = 10 : i32, message = "ie,je->ij"}> : () -> ()
    %cst_49 = arith.constant dense<0.000000e+00> : vector<16x16xf32>
    %136 = tpu.matmul %134, %135, %cst_49 {dimension_numbers = #tpu.dot_dimension_numbers<[1], [1], [0], [0], [0, 0, 1, 0], [], []>} : vector<16x2xf32>, vector<16x2xf32>, vector<16x16xf32> -> vector<16x16xf32>
    %cst_50 = arith.constant 0.000000e+00 : f32
    "tpu.trace_stop"() : () -> ()
    %137 = vector.broadcast %cst_50 : f32 to vector<16x16xf32>
    %138 = arith.cmpf oge, %136, %137 : vector<16x16xf32>
    %cst_51 = arith.constant 2.000000e-01 : f32
    %139 = vector.broadcast %cst_51 : f32 to vector<16x16xf32>
    %140 = arith.mulf %139, %136 : vector<16x16xf32>
    %141 = arith.select %138, %136, %140 : vector<16x16xi1>, vector<16x16xf32>
    %142 = arith.addf %141, %8 : vector<16x16xf32>
    %cst_52 = arith.constant dense<0xFF800000> : vector<16xf32>
    %143 = vector.multi_reduction <maximumf>, %142, %cst_52 [1] : vector<16x16xf32> to vector<16xf32>
    %144 = vector.shape_cast %143 : vector<16xf32> to vector<16x1xf32>
    %145 = vector.broadcast %144 : vector<16x1xf32> to vector<16x16xf32>
    %146 = arith.subf %142, %145 : vector<16x16xf32>
    %147 = math.exp %146 : vector<16x16xf32>
    %cst_53 = arith.constant dense<0.000000e+00> : vector<16xf32>
    %148 = vector.multi_reduction <add>, %147, %cst_53 [1] : vector<16x16xf32> to vector<16xf32>
    %149 = vector.shape_cast %148 : vector<16xf32> to vector<16x1xf32>
    %150 = tpu.reciprocal %149 : vector<16x1xf32> -> vector<16x1xf32>
    %151 = vector.broadcast %150 : vector<16x1xf32> to vector<16x16xf32>
    %152 = arith.mulf %147, %151 : vector<16x16xf32>
    %153 = vector.extract_strided_slice %129 {offsets = [0, 0], sizes = [16, 32], strides = [1, 1]} : vector<16x128xf32> to vector<16x32xf32>
    %154 = arith.truncf %152 : vector<16x16xf32> to vector<16x16xbf16>
    %155 = arith.truncf %153 : vector<16x32xf32> to vector<16x32xbf16>
    %cst_54 = arith.constant dense<0.000000e+00> : vector<16x32xf32>
    %156 = tpu.matmul %154, %155, %cst_54 {dimension_numbers = #tpu.dot_dimension_numbers<[1], [0], [0], [1], [0, 0, 1, 1], [], []>} : vector<16x16xbf16>, vector<16x32xbf16>, vector<16x32xf32> -> vector<16x32xf32>
    %157 = vector.extract_strided_slice %131 {offsets = [0, 1], sizes = [16, 1], strides = [1, 1]} : vector<16x8xf32> to vector<16x1xf32>
    %158 = vector.extract_strided_slice %131 {offsets = [0, 5], sizes = [16, 1], strides = [1, 1]} : vector<16x8xf32> to vector<16x1xf32>
    %159 = tpu.concatenate %157, %9 in 1 : vector<16x1xf32>, vector<16x1xf32> -> vector<16x2xf32>
    %160 = tpu.concatenate %9, %158 in 1 : vector<16x1xf32>, vector<16x1xf32> -> vector<16x2xf32>
    "tpu.trace_start"() <{level = 10 : i32, message = "ie,je->ij"}> : () -> ()
    %cst_55 = arith.constant dense<0.000000e+00> : vector<16x16xf32>
    %161 = tpu.matmul %159, %160, %cst_55 {dimension_numbers = #tpu.dot_dimension_numbers<[1], [1], [0], [0], [0, 0, 1, 0], [], []>} : vector<16x2xf32>, vector<16x2xf32>, vector<16x16xf32> -> vector<16x16xf32>
    %cst_56 = arith.constant 0.000000e+00 : f32
    "tpu.trace_stop"() : () -> ()
    %162 = vector.broadcast %cst_56 : f32 to vector<16x16xf32>
    %163 = arith.cmpf oge, %161, %162 : vector<16x16xf32>
    %cst_57 = arith.constant 2.000000e-01 : f32
    %164 = vector.broadcast %cst_57 : f32 to vector<16x16xf32>
    %165 = arith.mulf %164, %161 : vector<16x16xf32>
    %166 = arith.select %163, %161, %165 : vector<16x16xi1>, vector<16x16xf32>
    %167 = arith.addf %166, %8 : vector<16x16xf32>
    %cst_58 = arith.constant dense<0xFF800000> : vector<16xf32>
    %168 = vector.multi_reduction <maximumf>, %167, %cst_58 [1] : vector<16x16xf32> to vector<16xf32>
    %169 = vector.shape_cast %168 : vector<16xf32> to vector<16x1xf32>
    %170 = vector.broadcast %169 : vector<16x1xf32> to vector<16x16xf32>
    %171 = arith.subf %167, %170 : vector<16x16xf32>
    %172 = math.exp %171 : vector<16x16xf32>
    %cst_59 = arith.constant dense<0.000000e+00> : vector<16xf32>
    %173 = vector.multi_reduction <add>, %172, %cst_59 [1] : vector<16x16xf32> to vector<16xf32>
    %174 = vector.shape_cast %173 : vector<16xf32> to vector<16x1xf32>
    %175 = tpu.reciprocal %174 : vector<16x1xf32> -> vector<16x1xf32>
    %176 = vector.broadcast %175 : vector<16x1xf32> to vector<16x16xf32>
    %177 = arith.mulf %172, %176 : vector<16x16xf32>
    %178 = vector.extract_strided_slice %129 {offsets = [0, 32], sizes = [16, 32], strides = [1, 1]} : vector<16x128xf32> to vector<16x32xf32>
    %179 = arith.truncf %177 : vector<16x16xf32> to vector<16x16xbf16>
    %180 = arith.truncf %178 : vector<16x32xf32> to vector<16x32xbf16>
    %cst_60 = arith.constant dense<0.000000e+00> : vector<16x32xf32>
    %181 = tpu.matmul %179, %180, %cst_60 {dimension_numbers = #tpu.dot_dimension_numbers<[1], [0], [0], [1], [0, 0, 1, 1], [], []>} : vector<16x16xbf16>, vector<16x32xbf16>, vector<16x32xf32> -> vector<16x32xf32>
    %182 = vector.extract_strided_slice %131 {offsets = [0, 2], sizes = [16, 1], strides = [1, 1]} : vector<16x8xf32> to vector<16x1xf32>
    %183 = vector.extract_strided_slice %131 {offsets = [0, 6], sizes = [16, 1], strides = [1, 1]} : vector<16x8xf32> to vector<16x1xf32>
    %184 = tpu.concatenate %182, %9 in 1 : vector<16x1xf32>, vector<16x1xf32> -> vector<16x2xf32>
    %185 = tpu.concatenate %9, %183 in 1 : vector<16x1xf32>, vector<16x1xf32> -> vector<16x2xf32>
    "tpu.trace_start"() <{level = 10 : i32, message = "ie,je->ij"}> : () -> ()
    %cst_61 = arith.constant dense<0.000000e+00> : vector<16x16xf32>
    %186 = tpu.matmul %184, %185, %cst_61 {dimension_numbers = #tpu.dot_dimension_numbers<[1], [1], [0], [0], [0, 0, 1, 0], [], []>} : vector<16x2xf32>, vector<16x2xf32>, vector<16x16xf32> -> vector<16x16xf32>
    %cst_62 = arith.constant 0.000000e+00 : f32
    "tpu.trace_stop"() : () -> ()
    %187 = vector.broadcast %cst_62 : f32 to vector<16x16xf32>
    %188 = arith.cmpf oge, %186, %187 : vector<16x16xf32>
    %cst_63 = arith.constant 2.000000e-01 : f32
    %189 = vector.broadcast %cst_63 : f32 to vector<16x16xf32>
    %190 = arith.mulf %189, %186 : vector<16x16xf32>
    %191 = arith.select %188, %186, %190 : vector<16x16xi1>, vector<16x16xf32>
    %192 = arith.addf %191, %8 : vector<16x16xf32>
    %cst_64 = arith.constant dense<0xFF800000> : vector<16xf32>
    %193 = vector.multi_reduction <maximumf>, %192, %cst_64 [1] : vector<16x16xf32> to vector<16xf32>
    %194 = vector.shape_cast %193 : vector<16xf32> to vector<16x1xf32>
    %195 = vector.broadcast %194 : vector<16x1xf32> to vector<16x16xf32>
    %196 = arith.subf %192, %195 : vector<16x16xf32>
    %197 = math.exp %196 : vector<16x16xf32>
    %cst_65 = arith.constant dense<0.000000e+00> : vector<16xf32>
    %198 = vector.multi_reduction <add>, %197, %cst_65 [1] : vector<16x16xf32> to vector<16xf32>
    %199 = vector.shape_cast %198 : vector<16xf32> to vector<16x1xf32>
    %200 = tpu.reciprocal %199 : vector<16x1xf32> -> vector<16x1xf32>
    %201 = vector.broadcast %200 : vector<16x1xf32> to vector<16x16xf32>
    %202 = arith.mulf %197, %201 : vector<16x16xf32>
    %203 = vector.extract_strided_slice %129 {offsets = [0, 64], sizes = [16, 32], strides = [1, 1]} : vector<16x128xf32> to vector<16x32xf32>
    %204 = arith.truncf %202 : vector<16x16xf32> to vector<16x16xbf16>
    %205 = arith.truncf %203 : vector<16x32xf32> to vector<16x32xbf16>
    %cst_66 = arith.constant dense<0.000000e+00> : vector<16x32xf32>
    %206 = tpu.matmul %204, %205, %cst_66 {dimension_numbers = #tpu.dot_dimension_numbers<[1], [0], [0], [1], [0, 0, 1, 1], [], []>} : vector<16x16xbf16>, vector<16x32xbf16>, vector<16x32xf32> -> vector<16x32xf32>
    %207 = vector.extract_strided_slice %131 {offsets = [0, 3], sizes = [16, 1], strides = [1, 1]} : vector<16x8xf32> to vector<16x1xf32>
    %208 = vector.extract_strided_slice %131 {offsets = [0, 7], sizes = [16, 1], strides = [1, 1]} : vector<16x8xf32> to vector<16x1xf32>
    %209 = tpu.concatenate %207, %9 in 1 : vector<16x1xf32>, vector<16x1xf32> -> vector<16x2xf32>
    %210 = tpu.concatenate %9, %208 in 1 : vector<16x1xf32>, vector<16x1xf32> -> vector<16x2xf32>
    "tpu.trace_start"() <{level = 10 : i32, message = "ie,je->ij"}> : () -> ()
    %cst_67 = arith.constant dense<0.000000e+00> : vector<16x16xf32>
    %211 = tpu.matmul %209, %210, %cst_67 {dimension_numbers = #tpu.dot_dimension_numbers<[1], [1], [0], [0], [0, 0, 1, 0], [], []>} : vector<16x2xf32>, vector<16x2xf32>, vector<16x16xf32> -> vector<16x16xf32>
    %cst_68 = arith.constant 0.000000e+00 : f32
    "tpu.trace_stop"() : () -> ()
    %212 = vector.broadcast %cst_68 : f32 to vector<16x16xf32>
    %213 = arith.cmpf oge, %211, %212 : vector<16x16xf32>
    %cst_69 = arith.constant 2.000000e-01 : f32
    %214 = vector.broadcast %cst_69 : f32 to vector<16x16xf32>
    %215 = arith.mulf %214, %211 : vector<16x16xf32>
    %216 = arith.select %213, %211, %215 : vector<16x16xi1>, vector<16x16xf32>
    %217 = arith.addf %216, %8 : vector<16x16xf32>
    %cst_70 = arith.constant dense<0xFF800000> : vector<16xf32>
    %218 = vector.multi_reduction <maximumf>, %217, %cst_70 [1] : vector<16x16xf32> to vector<16xf32>
    %219 = vector.shape_cast %218 : vector<16xf32> to vector<16x1xf32>
    %220 = vector.broadcast %219 : vector<16x1xf32> to vector<16x16xf32>
    %221 = arith.subf %217, %220 : vector<16x16xf32>
    %222 = math.exp %221 : vector<16x16xf32>
    %cst_71 = arith.constant dense<0.000000e+00> : vector<16xf32>
    %223 = vector.multi_reduction <add>, %222, %cst_71 [1] : vector<16x16xf32> to vector<16xf32>
    %224 = vector.shape_cast %223 : vector<16xf32> to vector<16x1xf32>
    %225 = tpu.reciprocal %224 : vector<16x1xf32> -> vector<16x1xf32>
    %226 = vector.broadcast %225 : vector<16x1xf32> to vector<16x16xf32>
    %227 = arith.mulf %222, %226 : vector<16x16xf32>
    %228 = vector.extract_strided_slice %129 {offsets = [0, 96], sizes = [16, 32], strides = [1, 1]} : vector<16x128xf32> to vector<16x32xf32>
    %229 = arith.truncf %227 : vector<16x16xf32> to vector<16x16xbf16>
    %230 = arith.truncf %228 : vector<16x32xf32> to vector<16x32xbf16>
    %cst_72 = arith.constant dense<0.000000e+00> : vector<16x32xf32>
    %231 = tpu.matmul %229, %230, %cst_72 {dimension_numbers = #tpu.dot_dimension_numbers<[1], [0], [0], [1], [0, 0, 1, 1], [], []>} : vector<16x16xbf16>, vector<16x32xbf16>, vector<16x32xf32> -> vector<16x32xf32>
    %232 = tpu.concatenate %156, %181, %206, %231 in 1 : vector<16x32xf32>, vector<16x32xf32>, vector<16x32xf32>, vector<16x32xf32> -> vector<16x128xf32>
    %c0_73 = arith.constant 0 : index
    %c0_74 = arith.constant 0 : index
    %233 = vector.load %arg9[%c0_73, %c0_74] : memref<1x128xf32, #tpu.memory_space<vmem>>, vector<1x128xf32>
    %234 = vector.broadcast %233 : vector<1x128xf32> to vector<16x128xf32>
    %235 = arith.addf %232, %234 : vector<16x128xf32>
    %cst_75 = arith.constant 0.000000e+00 : f32
    %236 = vector.broadcast %cst_75 : f32 to vector<16x128xf32>
    %237 = arith.cmpf ogt, %235, %236 : vector<16x128xf32>
    %cst_76 = arith.constant 0.000000e+00 : f32
    %238 = vector.broadcast %cst_76 : f32 to vector<16x128xf32>
    %239 = arith.minimumf %235, %238 : vector<16x128xf32>
    %240 = math.exp %239 : vector<16x128xf32>
    %cst_77 = arith.constant 1.000000e+00 : f32
    %241 = vector.broadcast %cst_77 : f32 to vector<16x128xf32>
    %242 = arith.subf %240, %241 : vector<16x128xf32>
    %243 = arith.select %237, %235, %242 : vector<16x128xi1>, vector<16x128xf32>
    %244 = arith.truncf %243 : vector<16x128xf32> to vector<16x128xbf16>
    %c0_78 = arith.constant 0 : index
    %c0_79 = arith.constant 0 : index
    %245 = vector.load %arg10[%c0_78, %c0_79] : memref<128x32xbf16, #tpu.memory_space<vmem>>, vector<128x32xbf16>
    %cst_80 = arith.constant dense<0.000000e+00> : vector<16x32xf32>
    %246 = tpu.matmul %244, %245, %cst_80 {dimension_numbers = #tpu.dot_dimension_numbers<[1], [0], [0], [1], [0, 0, 1, 1], [], []>} : vector<16x128xbf16>, vector<128x32xbf16>, vector<16x32xf32> -> vector<16x32xf32>
    %c0_81 = arith.constant 0 : index
    %c0_82 = arith.constant 0 : index
    %247 = vector.load %arg11[%c0_81, %c0_82] : memref<128x2xf32, #tpu.memory_space<vmem>>, vector<128x2xf32>
    %cst_83 = arith.constant dense<0.000000e+00> : vector<16x2xf32>
    %248 = tpu.matmul %243, %247, %cst_83 {dimension_numbers = #tpu.dot_dimension_numbers<[1], [0], [0], [1], [0, 0, 1, 1], [], []>} : vector<16x128xf32>, vector<128x2xf32>, vector<16x2xf32> -> vector<16x2xf32>
    %249 = vector.extract_strided_slice %248 {offsets = [0, 0], sizes = [16, 1], strides = [1, 1]} : vector<16x2xf32> to vector<16x1xf32>
    %250 = vector.extract_strided_slice %248 {offsets = [0, 1], sizes = [16, 1], strides = [1, 1]} : vector<16x2xf32> to vector<16x1xf32>
    %251 = tpu.concatenate %249, %9 in 1 : vector<16x1xf32>, vector<16x1xf32> -> vector<16x2xf32>
    %252 = tpu.concatenate %9, %250 in 1 : vector<16x1xf32>, vector<16x1xf32> -> vector<16x2xf32>
    "tpu.trace_start"() <{level = 10 : i32, message = "ie,je->ij"}> : () -> ()
    %cst_84 = arith.constant dense<0.000000e+00> : vector<16x16xf32>
    %253 = tpu.matmul %251, %252, %cst_84 {dimension_numbers = #tpu.dot_dimension_numbers<[1], [1], [0], [0], [0, 0, 1, 0], [], []>} : vector<16x2xf32>, vector<16x2xf32>, vector<16x16xf32> -> vector<16x16xf32>
    %cst_85 = arith.constant 0.000000e+00 : f32
    "tpu.trace_stop"() : () -> ()
    %254 = vector.broadcast %cst_85 : f32 to vector<16x16xf32>
    %255 = arith.cmpf oge, %253, %254 : vector<16x16xf32>
    %cst_86 = arith.constant 2.000000e-01 : f32
    %256 = vector.broadcast %cst_86 : f32 to vector<16x16xf32>
    %257 = arith.mulf %256, %253 : vector<16x16xf32>
    %258 = arith.select %255, %253, %257 : vector<16x16xi1>, vector<16x16xf32>
    %259 = arith.addf %258, %8 : vector<16x16xf32>
    %cst_87 = arith.constant dense<0xFF800000> : vector<16xf32>
    %260 = vector.multi_reduction <maximumf>, %259, %cst_87 [1] : vector<16x16xf32> to vector<16xf32>
    %261 = vector.shape_cast %260 : vector<16xf32> to vector<16x1xf32>
    %262 = vector.broadcast %261 : vector<16x1xf32> to vector<16x16xf32>
    %263 = arith.subf %259, %262 : vector<16x16xf32>
    %264 = math.exp %263 : vector<16x16xf32>
    %cst_88 = arith.constant dense<0.000000e+00> : vector<16xf32>
    %265 = vector.multi_reduction <add>, %264, %cst_88 [1] : vector<16x16xf32> to vector<16xf32>
    %266 = vector.shape_cast %265 : vector<16xf32> to vector<16x1xf32>
    %267 = tpu.reciprocal %266 : vector<16x1xf32> -> vector<16x1xf32>
    %268 = vector.broadcast %267 : vector<16x1xf32> to vector<16x16xf32>
    %269 = arith.mulf %264, %268 : vector<16x16xf32>
    %270 = arith.truncf %269 : vector<16x16xf32> to vector<16x16xbf16>
    %271 = arith.truncf %246 : vector<16x32xf32> to vector<16x32xbf16>
    %cst_89 = arith.constant dense<0.000000e+00> : vector<16x32xf32>
    %272 = tpu.matmul %270, %271, %cst_89 {dimension_numbers = #tpu.dot_dimension_numbers<[1], [0], [0], [1], [0, 0, 1, 1], [], []>} : vector<16x16xbf16>, vector<16x32xbf16>, vector<16x32xf32> -> vector<16x32xf32>
    %c0_90 = arith.constant 0 : index
    %c0_91 = arith.constant 0 : index
    %273 = vector.load %arg12[%c0_90, %c0_91] : memref<1x32xf32, #tpu.memory_space<vmem>>, vector<1x32xf32>
    %274 = vector.broadcast %273 : vector<1x32xf32> to vector<16x32xf32>
    %275 = arith.addf %272, %274 : vector<16x32xf32>
    %c0_92 = arith.constant 0 : index
    %c0_93 = arith.constant 0 : index
    %c0_94 = arith.constant 0 : index
    %276 = vector.load %arg3[%c0_92, %c0_93, %c0_94] : memref<1x2x16xf32, #tpu.memory_space<vmem>>, vector<1x2x16xf32>
    %277 = vector.shape_cast %276 : vector<1x2x16xf32> to vector<2x16xf32>
    %cst_95 = arith.constant dense<0.000000e+00> : vector<2x32xf32>
    %278 = tpu.matmul %277, %275, %cst_95 {dimension_numbers = #tpu.dot_dimension_numbers<[1], [0], [0], [1], [0, 0, 1, 1], [], []>} : vector<2x16xf32>, vector<16x32xf32>, vector<2x32xf32> -> vector<2x32xf32>
    %c0_96 = arith.constant 0 : index
    %c0_97 = arith.constant 0 : index
    %279 = vector.load %arg13[%c0_96, %c0_97] : memref<32x1xf32, #tpu.memory_space<vmem>>, vector<32x1xf32>
    %cst_98 = arith.constant dense<0.000000e+00> : vector<2x1xf32>
    %280 = tpu.matmul %278, %279, %cst_98 {dimension_numbers = #tpu.dot_dimension_numbers<[1], [0], [0], [1], [0, 0, 1, 1], [], []>} : vector<2x32xf32>, vector<32x1xf32>, vector<2x1xf32> -> vector<2x1xf32>
    %c0_99 = arith.constant 0 : index
    %c0_100 = arith.constant 0 : index
    %281 = vector.load %arg14[%c0_99, %c0_100] : memref<1x1xf32, #tpu.memory_space<vmem>>, vector<1x1xf32>
    %282 = vector.broadcast %281 : vector<1x1xf32> to vector<2x1xf32>
    %283 = arith.addf %280, %282 : vector<2x1xf32>
    %c0_101 = arith.constant 0 : index
    %c0_102 = arith.constant 0 : index
    %c0_103 = arith.constant 0 : index
    %284 = vector.load %arg15[%c0_101, %c0_102, %c0_103] : memref<1x2x1xf32, #tpu.memory_space<vmem>>, vector<1x2x1xf32>
    %285 = vector.shape_cast %284 : vector<1x2x1xf32> to vector<2x1xf32>
    %286 = vector.shape_cast %283 : vector<2x1xf32> to vector<1x2x1xf32>
    tpu.vector_store %arg15[%c0_101, %c0_102, %c0_103], %286 {strides = array<i32>} : memref<1x2x1xf32, #tpu.memory_space<vmem>>, vector<1x2x1xf32>,
    return
  }
  func.func @transform_0(%arg0: i32) -> (i32, i32, i32) {
    %c0_i32 = arith.constant 0 : i32
    %c0_i32_0 = arith.constant 0 : i32
    %c0_i32_1 = arith.constant 0 : i32
    return %arg0, %c0_i32, %c0_i32_0 : i32, i32, i32
  }
  func.func @transform_1(%arg0: i32) -> (i32, i32, i32) {
    %c0_i32 = arith.constant 0 : i32
    %c0_i32_0 = arith.constant 0 : i32
    %c0_i32_1 = arith.constant 0 : i32
    return %arg0, %c0_i32, %c0_i32_0 : i32, i32, i32
  }
  func.func @transform_2(%arg0: i32) -> (i32, i32, i32) {
    %c0_i32 = arith.constant 0 : i32
    %c0_i32_0 = arith.constant 0 : i32
    %c0_i32_1 = arith.constant 0 : i32
    return %arg0, %c0_i32, %c0_i32_0 : i32, i32, i32
  }
  func.func @transform_3(%arg0: i32) -> (i32, i32) {
    %c0_i32 = arith.constant 0 : i32
    %c0_i32_0 = arith.constant 0 : i32
    %c0_i32_1 = arith.constant 0 : i32
    return %c0_i32, %c0_i32_0 : i32, i32
  }
  func.func @transform_4(%arg0: i32) -> (i32, i32) {
    %c0_i32 = arith.constant 0 : i32
    %c0_i32_0 = arith.constant 0 : i32
    %c0_i32_1 = arith.constant 0 : i32
    return %c0_i32, %c0_i32_0 : i32, i32
  }
  func.func @transform_5(%arg0: i32) -> (i32, i32) {
    %c0_i32 = arith.constant 0 : i32
    %c0_i32_0 = arith.constant 0 : i32
    %c0_i32_1 = arith.constant 0 : i32
    return %c0_i32, %c0_i32_0 : i32, i32
  }
  func.func @transform_6(%arg0: i32) -> (i32, i32) {
    %c0_i32 = arith.constant 0 : i32
    %c0_i32_0 = arith.constant 0 : i32
    %c0_i32_1 = arith.constant 0 : i32
    return %c0_i32, %c0_i32_0 : i32, i32
  }
  func.func @transform_7(%arg0: i32) -> (i32, i32) {
    %c0_i32 = arith.constant 0 : i32
    %c0_i32_0 = arith.constant 0 : i32
    %c0_i32_1 = arith.constant 0 : i32
    return %c0_i32, %c0_i32_0 : i32, i32
  }
  func.func @transform_8(%arg0: i32) -> (i32, i32) {
    %c0_i32 = arith.constant 0 : i32
    %c0_i32_0 = arith.constant 0 : i32
    %c0_i32_1 = arith.constant 0 : i32
    return %c0_i32, %c0_i32_0 : i32, i32
  }
  func.func @transform_9(%arg0: i32) -> (i32, i32) {
    %c0_i32 = arith.constant 0 : i32
    %c0_i32_0 = arith.constant 0 : i32
    %c0_i32_1 = arith.constant 0 : i32
    return %c0_i32, %c0_i32_0 : i32, i32
  }
  func.func @transform_10(%arg0: i32) -> (i32, i32) {
    %c0_i32 = arith.constant 0 : i32
    %c0_i32_0 = arith.constant 0 : i32
    %c0_i32_1 = arith.constant 0 : i32
    return %c0_i32, %c0_i32_0 : i32, i32
  }
  func.func @transform_11(%arg0: i32) -> (i32, i32) {
    %c0_i32 = arith.constant 0 : i32
    %c0_i32_0 = arith.constant 0 : i32
    %c0_i32_1 = arith.constant 0 : i32
    return %c0_i32, %c0_i32_0 : i32, i32
  }
  func.func @transform_12(%arg0: i32) -> (i32, i32) {
    %c0_i32 = arith.constant 0 : i32
    %c0_i32_0 = arith.constant 0 : i32
    %c0_i32_1 = arith.constant 0 : i32
    return %c0_i32, %c0_i32_0 : i32, i32
  }
  func.func @transform_13(%arg0: i32) -> (i32, i32) {
    %c0_i32 = arith.constant 0 : i32
    %c0_i32_0 = arith.constant 0 : i32
    %c0_i32_1 = arith.constant 0 : i32
    return %c0_i32, %c0_i32_0 : i32, i32
  }
  func.func @transform_14(%arg0: i32) -> (i32, i32, i32) {
    %c0_i32 = arith.constant 0 : i32
    %c0_i32_0 = arith.constant 0 : i32
    %c0_i32_1 = arith.constant 0 : i32
    return %arg0, %c0_i32, %c0_i32_0 : i32, i32, i32
  }
}

</mosaic_0001>

<llo_original>
// kernel: forward.1
$region0: #{forward.1}
  #allocation0 [shape = 'u32[]', space=smem, size = 0x4, offset = 0x4, fixed_abs, tag = 'smem constant byte address 0x4 - core index']
  #allocation1 [shape = 'u32[72,128]{1,0:T(1,128)}', space=vmem, size = 0x9000, scoped, tag = 'internal scratch']
  #allocation2 [shape = 'f32[1,1]{1,0:T(1,128)S(1)}', space=vmem, size = 0x200, scoped, tag = 'scoped memory for forward.1']
  %s0 = inlined_call_operand.vmem [shape: f32[2,16,8], index: 0, kind: input, shape index: {}]
  %s1 = inlined_call_operand.vmem [shape: f32[2,16,16], index: 1, kind: input, shape index: {}]
  %s2 = inlined_call_operand.vmem [shape: f32[2,2,16], index: 2, kind: input, shape index: {}]
  %s3 = inlined_call_operand.vmem [shape: bf16[8,128], index: 3, kind: input, shape index: {}]
  %s4 = inlined_call_operand.vmem [shape: f32[8,8], index: 4, kind: input, shape index: {}]
  %s5 = inlined_call_operand.vmem [shape: f32[1,128], index: 5, kind: input, shape index: {}, may-alias: {5,8}]
  %s6 = inlined_call_operand.hbm [shape: bf16[128,128], index: 6, kind: input, shape index: {}]
  %s7 = inlined_call_operand.hbm [shape: f32[128,8], index: 7, kind: input, shape index: {}]
  %s8 = inlined_call_operand.vmem [shape: f32[1,128], index: 8, kind: input, shape index: {}, may-alias: {5,8}]
  %s9 = inlined_call_operand.hbm [shape: bf16[128,32], index: 9, kind: input, shape index: {}]
  %s10 = inlined_call_operand.hbm [shape: f32[128,2], index: 10, kind: input, shape index: {}]
  %s11 = inlined_call_operand.vmem [shape: f32[1,32], index: 11, kind: input, shape index: {}]
  %s12 = inlined_call_operand.hbm [shape: f32[32,1], index: 12, kind: input, shape index: {}]
  %s13 = inlined_call_operand.<no memory space> [shape: f32[1,1], index: 13, kind: input, shape index: {}]
  %s14 = inlined_call_operand.vmem [shape: f32[2,2,1], index: 14, kind: output, shape index: {}]
  %s15 = sld [smem:[#allocation0]]
  $region109: #{forward.1} parent=0
    _
  %s17 = ssub.s32 1, %s15
  %s18 = scalar_select 0, %s17, %s15
  %v19 = vstv %s13
  %20 = vst [vmem:[#allocation2] sm:$0x1] %v19
  $region1: #{forward.1} parent=0
    #allocation3 [shape = 'u8[32768]{0}', space=vmem, size = 0x8000, scoped, tag = 'input window, operand 6, single buffered']
    #allocation4 [shape = 's32[2]{0}', space=sflag, size = 0x8, scoped, tag = 'scoped memory for forward.1']
    #allocation5 [shape = 'u8[65536]{0}', space=vmem, size = 0x10000, scoped, tag = 'input window, operand 7, single buffered']
    #allocation6 [shape = 's32[1]{0}', space=sflag, size = 0x4, scoped, tag = 'scoped memory for forward.1']
    #allocation7 [shape = 'u8[32768]{0}', space=vmem, size = 0x8000, scoped, tag = 'input window, operand 9, single buffered']
    #allocation8 [shape = 'u8[65536]{0}', space=vmem, size = 0x10000, scoped, tag = 'input window, operand 10, single buffered']
    #allocation9 [shape = 's32[1]{0}', space=sflag, size = 0x4, scoped, tag = 'scoped memory for forward.1']
    #allocation10 [shape = 'u8[16384]{0}', space=vmem, size = 0x4000, scoped, tag = 'input window, operand 12, single buffered']
    %21 = vsyncpa [#allocation4], 0
    %22 = vsyncpa [#allocation6], 0
    %23 = vsyncpa [#allocation9], 0
    loop: start=0, step=1, limit=4
    $region2: #{forward.1} parent=1 // loop_pre_header
      _
    $region3: #{forward.1} parent=1 // loop_header
      %s25 = sphi 0, %s29
      %p26 = scmp.ge.s32.totalorder %s25, 4
      %s35 = sphi 0, %s37
      %s38 = sphi 0, %s35
      %s39 = sphi 0, %s38
      %s55 = sphi 0, %s39
      %s61 = sphi 0, %s63
      %s64 = sphi 0, %s61
      %s65 = sphi 0, %s64
      %s81 = sphi 0, %s65
      %s87 = sphi 0, %s89
      %s90 = sphi 0, %s87
      %s91 = sphi 0, %s90
      %s107 = sphi 0, %s91
      %s111 = sphi 0, %s111
      %s113 = sphi 0, %s111
      %s114 = sphi 0, %s113
      %s128 = sphi 0, %s114
      %s132 = sphi 0, %s132
      %s134 = sphi 0, %s132
      %s135 = sphi 0, %s134
      %s149 = sphi 0, %s135
      %s153 = sphi 0, %s153
      %s155 = sphi 0, %s153
      %s156 = sphi 0, %s155
      %s170 = sphi 0, %s156
      %s174 = sphi 0, %s174
      %s176 = sphi 0, %s174
      %s177 = sphi 0, %s176
      %s191 = sphi 0, %s177
      %s195 = sphi 0, %s195
      %s197 = sphi 0, %s195
      %s198 = sphi 0, %s197
      %s212 = sphi 0, %s198
      %s216 = sphi 0, %s216
      %s218 = sphi 0, %s216
      %s219 = sphi 0, %s218
      %s233 = sphi 0, %s219
      %s237 = sphi 0, %s237
      %s239 = sphi 0, %s237
      %s240 = sphi 0, %s239
      %s254 = sphi 0, %s240
      %s258 = sphi 0, %s258
      %s260 = sphi 0, %s258
      %s261 = sphi 0, %s260
      %s275 = sphi 0, %s261
      %s279 = sphi 0, %s279
      %s281 = sphi 0, %s279
      %s282 = sphi 0, %s281
      %s296 = sphi 0, %s282
      %s300 = sphi 0, %s300
      %s302 = sphi 0, %s300
      %s303 = sphi 0, %s302
      %s317 = sphi 0, %s303
      %s321 = sphi 0, %s321
      %s323 = sphi 0, %s321
      %s324 = sphi 0, %s323
      %s338 = sphi 0, %s324
      %s344 = sphi 0, %s346
      %s347 = sphi 0, %s344
      %s348 = sphi 0, %s347
      %s364 = sphi 0, %s348
    $region4: #{forward.1} parent=1 // loop_header_branch
      %28 = sbr.rel (%p26) target = $region8
    $region5: #{forward.1} parent=1 // loop_body
      %s30 = ssub.s32 %s25, 1
      %s31 = ssub.s32 %s25, 2
      %s32 = sadd.s32 %s25, 1
      %s33 = ssub.s32 %s25, %s32
      %p34 = scmp.eq.s32.totalorder %s33, 0
      %s36 = sadd.s32 %s35, 1
      %s37 = scalar_select %p34, %s35, %s36
      %p40 = pneg %p34
      %p41 = scmp.eq.s32.totalorder %s25, 1
      %p42 = por %p40, %p41
      %p43 = scmp.ne.s32.totalorder %s35, %s38
      %p44 = scmp.eq.s32.totalorder %s25, 0
      %p45 = por %p43, %p44
      %p46 = scmp.ne.s32.totalorder %s35, %s38
      %p47 = scmp.eq.s32.totalorder %s30, 1
      %p48 = por %p46, %p47
      %p49 = scmp.ne.s32.totalorder %s38, %s39
      %p50 = scmp.eq.s32.totalorder %s30, 0
      %p51 = por %p49, %p50
      %p52 = scmp.ne.s32.totalorder %s38, %s39
      %p53 = scmp.eq.s32.totalorder %s31, 1
      %p54 = por %p52, %p53
      %p56 = scmp.ne.s32.totalorder %s39, %s55
      %p57 = scmp.eq.s32.totalorder %s31, 0
      %p58 = por %p56, %p57
      %s59 = ssub.s32 %s25, %s32
      %p60 = scmp.eq.s32.totalorder %s59, 0
      %s62 = sadd.s32 %s61, 1
      %s63 = scalar_select %p60, %s61, %s62
      %p66 = pneg %p60
      %p67 = scmp.eq.s32.totalorder %s25, 1
      %p68 = por %p66, %p67
      %p69 = scmp.ne.s32.totalorder %s61, %s64
      %p70 = scmp.eq.s32.totalorder %s25, 0
      %p71 = por %p69, %p70
      %p72 = scmp.ne.s32.totalorder %s61, %s64
      %p73 = scmp.eq.s32.totalorder %s30, 1
      %p74 = por %p72, %p73
      %p75 = scmp.ne.s32.totalorder %s64, %s65
      %p76 = scmp.eq.s32.totalorder %s30, 0
      %p77 = por %p75, %p76
      %p78 = scmp.ne.s32.totalorder %s64, %s65
      %p79 = scmp.eq.s32.totalorder %s31, 1
      %p80 = por %p78, %p79
      %p82 = scmp.ne.s32.totalorder %s65, %s81
      %p83 = scmp.eq.s32.totalorder %s31, 0
      %p84 = por %p82, %p83
      %s85 = ssub.s32 %s25, %s32
      %p86 = scmp.eq.s32.totalorder %s85, 0
      %s88 = sadd.s32 %s87, 1
      %s89 = scalar_select %p86, %s87, %s88
      %p92 = pneg %p86
      %p93 = scmp.eq.s32.totalorder %s25, 1
      %p94 = por %p92, %p93
      %p95 = scmp.ne.s32.totalorder %s87, %s90
      %p96 = scmp.eq.s32.totalorder %s25, 0
      %p97 = por %p95, %p96
      %p98 = scmp.ne.s32.totalorder %s87, %s90
      %p99 = scmp.eq.s32.totalorder %s30, 1
      %p100 = por %p98, %p99
      %p101 = scmp.ne.s32.totalorder %s90, %s91
      %p102 = scmp.eq.s32.totalorder %s30, 0
      %p103 = por %p101, %p102
      %p104 = scmp.ne.s32.totalorder %s90, %s91
      %p105 = scmp.eq.s32.totalorder %s31, 1
      %p106 = por %p104, %p105
      %p108 = scmp.ne.s32.totalorder %s91, %s107
      %p109 = scmp.eq.s32.totalorder %s31, 0
      %p110 = por %p108, %p109
      %s112 = sadd.s32 %s111, 1
      %p115 = scmp.eq.s32.totalorder %s25, 1
      %p116 = scmp.ne.s32.totalorder %s111, %s113
      %p117 = scmp.eq.s32.totalorder %s25, 0
      %p118 = por %p116, %p117
      %p119 = scmp.ne.s32.totalorder %s111, %s113
      %p120 = scmp.eq.s32.totalorder %s30, 1
      %p121 = por %p119, %p120
      %p122 = scmp.ne.s32.totalorder %s113, %s114
      %p123 = scmp.eq.s32.totalorder %s30, 0
      %p124 = por %p122, %p123
      %p125 = scmp.ne.s32.totalorder %s113, %s114
      %p126 = scmp.eq.s32.totalorder %s31, 1
      %p127 = por %p125, %p126
      %p129 = scmp.ne.s32.totalorder %s114, %s128
      %p130 = scmp.eq.s32.totalorder %s31, 0
      %p131 = por %p129, %p130
      %s133 = sadd.s32 %s132, 1
      %p136 = scmp.eq.s32.totalorder %s25, 1
      %p137 = scmp.ne.s32.totalorder %s132, %s134
      %p138 = scmp.eq.s32.totalorder %s25, 0
      %p139 = por %p137, %p138
      %p140 = scmp.ne.s32.totalorder %s132, %s134
      %p141 = scmp.eq.s32.totalorder %s30, 1
      %p142 = por %p140, %p141
      %p143 = scmp.ne.s32.totalorder %s134, %s135
      %p144 = scmp.eq.s32.totalorder %s30, 0
      %p145 = por %p143, %p144
      %p146 = scmp.ne.s32.totalorder %s134, %s135
      %p147 = scmp.eq.s32.totalorder %s31, 1
      %p148 = por %p146, %p147
      %p150 = scmp.ne.s32.totalorder %s135, %s149
      %p151 = scmp.eq.s32.totalorder %s31, 0
      %p152 = por %p150, %p151
      %s154 = sadd.s32 %s153, 1
      %p157 = scmp.eq.s32.totalorder %s25, 1
      %p158 = scmp.ne.s32.totalorder %s153, %s155
      %p159 = scmp.eq.s32.totalorder %s25, 0
      %p160 = por %p158, %p159
      %p161 = scmp.ne.s32.totalorder %s153, %s155
      %p162 = scmp.eq.s32.totalorder %s30, 1
      %p163 = por %p161, %p162
      %p164 = scmp.ne.s32.totalorder %s155, %s156
      %p165 = scmp.eq.s32.totalorder %s30, 0
      %p166 = por %p164, %p165
      %p167 = scmp.ne.s32.totalorder %s155, %s156
      %p168 = scmp.eq.s32.totalorder %s31, 1
      %p169 = por %p167, %p168
      %p171 = scmp.ne.s32.totalorder %s156, %s170
      %p172 = scmp.eq.s32.totalorder %s31, 0
      %p173 = por %p171, %p172
      %s175 = sadd.s32 %s174, 1
      %p178 = scmp.eq.s32.totalorder %s25, 1
      %p179 = scmp.ne.s32.totalorder %s174, %s176
      %p180 = scmp.eq.s32.totalorder %s25, 0
      %p181 = por %p179, %p180
      %p182 = scmp.ne.s32.totalorder %s174, %s176
      %p183 = scmp.eq.s32.totalorder %s30, 1
      %p184 = por %p182, %p183
      %p185 = scmp.ne.s32.totalorder %s176, %s177
      %p186 = scmp.eq.s32.totalorder %s30, 0
      %p187 = por %p185, %p186
      %p188 = scmp.ne.s32.totalorder %s176, %s177
      %p189 = scmp.eq.s32.totalorder %s31, 1
      %p190 = por %p188, %p189
      %p192 = scmp.ne.s32.totalorder %s177, %s191
      %p193 = scmp.eq.s32.totalorder %s31, 0
      %p194 = por %p192, %p193
      %s196 = sadd.s32 %s195, 1
      %p199 = scmp.eq.s32.totalorder %s25, 1
      %p200 = scmp.ne.s32.totalorder %s195, %s197
      %p201 = scmp.eq.s32.totalorder %s25, 0
      %p202 = por %p200, %p201
      %p203 = scmp.ne.s32.totalorder %s195, %s197
      %p204 = scmp.eq.s32.totalorder %s30, 1
      %p205 = por %p203, %p204
      %p206 = scmp.ne.s32.totalorder %s197, %s198
      %p207 = scmp.eq.s32.totalorder %s30, 0
      %p208 = por %p206, %p207
      %p209 = scmp.ne.s32.totalorder %s197, %s198
      %p210 = scmp.eq.s32.totalorder %s31, 1
      %p211 = por %p209, %p210
      %p213 = scmp.ne.s32.totalorder %s198, %s212
      %p214 = scmp.eq.s32.totalorder %s31, 0
      %p215 = por %p213, %p214
      %s217 = sadd.s32 %s216, 1
      %p220 = scmp.eq.s32.totalorder %s25, 1
      %p221 = scmp.ne.s32.totalorder %s216, %s218
      %p222 = scmp.eq.s32.totalorder %s25, 0
      %p223 = por %p221, %p222
      %p224 = scmp.ne.s32.totalorder %s216, %s218
      %p225 = scmp.eq.s32.totalorder %s30, 1
      %p226 = por %p224, %p225
      %p227 = scmp.ne.s32.totalorder %s218, %s219
      %p228 = scmp.eq.s32.totalorder %s30, 0
      %p229 = por %p227, %p228
      %p230 = scmp.ne.s32.totalorder %s218, %s219
      %p231 = scmp.eq.s32.totalorder %s31, 1
      %p232 = por %p230, %p231
      %p234 = scmp.ne.s32.totalorder %s219, %s233
      %p235 = scmp.eq.s32.totalorder %s31, 0
      %p236 = por %p234, %p235
      %s238 = sadd.s32 %s237, 1
      %p241 = scmp.eq.s32.totalorder %s25, 1
      %p242 = scmp.ne.s32.totalorder %s237, %s239
      %p243 = scmp.eq.s32.totalorder %s25, 0
      %p244 = por %p242, %p243
      %p245 = scmp.ne.s32.totalorder %s237, %s239
      %p246 = scmp.eq.s32.totalorder %s30, 1
      %p247 = por %p245, %p246
      %p248 = scmp.ne.s32.totalorder %s239, %s240
      %p249 = scmp.eq.s32.totalorder %s30, 0
      %p250 = por %p248, %p249
      %p251 = scmp.ne.s32.totalorder %s239, %s240
      %p252 = scmp.eq.s32.totalorder %s31, 1
      %p253 = por %p251, %p252
      %p255 = scmp.ne.s32.totalorder %s240, %s254
      %p256 = scmp.eq.s32.totalorder %s31, 0
      %p257 = por %p255, %p256
      %s259 = sadd.s32 %s258, 1
      %p262 = scmp.eq.s32.totalorder %s25, 1
      %p263 = scmp.ne.s32.totalorder %s258, %s260
      %p264 = scmp.eq.s32.totalorder %s25, 0
      %p265 = por %p263, %p264
      %p266 = scmp.ne.s32.totalorder %s258, %s260
      %p267 = scmp.eq.s32.totalorder %s30, 1
      %p268 = por %p266, %p267
      %p269 = scmp.ne.s32.totalorder %s260, %s261
      %p270 = scmp.eq.s32.totalorder %s30, 0
      %p271 = por %p269, %p270
      %p272 = scmp.ne.s32.totalorder %s260, %s261
      %p273 = scmp.eq.s32.totalorder %s31, 1
      %p274 = por %p272, %p273
      %p276 = scmp.ne.s32.totalorder %s261, %s275
      %p277 = scmp.eq.s32.totalorder %s31, 0
      %p278 = por %p276, %p277
      %s280 = sadd.s32 %s279, 1
      %p283 = scmp.eq.s32.totalorder %s25, 1
      %p284 = scmp.ne.s32.totalorder %s279, %s281
      %p285 = scmp.eq.s32.totalorder %s25, 0
      %p286 = por %p284, %p285
      %p287 = scmp.ne.s32.totalorder %s279, %s281
      %p288 = scmp.eq.s32.totalorder %s30, 1
      %p289 = por %p287, %p288
      %p290 = scmp.ne.s32.totalorder %s281, %s282
      %p291 = scmp.eq.s32.totalorder %s30, 0
      %p292 = por %p290, %p291
      %p293 = scmp.ne.s32.totalorder %s281, %s282
      %p294 = scmp.eq.s32.totalorder %s31, 1
      %p295 = por %p293, %p294
      %p297 = scmp.ne.s32.totalorder %s282, %s296
      %p298 = scmp.eq.s32.totalorder %s31, 0
      %p299 = por %p297, %p298
      %s301 = sadd.s32 %s300, 1
      %p304 = scmp.eq.s32.totalorder %s25, 1
      %p305 = scmp.ne.s32.totalorder %s300, %s302
      %p306 = scmp.eq.s32.totalorder %s25, 0
      %p307 = por %p305, %p306
      %p308 = scmp.ne.s32.totalorder %s300, %s302
      %p309 = scmp.eq.s32.totalorder %s30, 1
      %p310 = por %p308, %p309
      %p311 = scmp.ne.s32.totalorder %s302, %s303
      %p312 = scmp.eq.s32.totalorder %s30, 0
      %p313 = por %p311, %p312
      %p314 = scmp.ne.s32.totalorder %s302, %s303
      %p315 = scmp.eq.s32.totalorder %s31, 1
      %p316 = por %p314, %p315
      %p318 = scmp.ne.s32.totalorder %s303, %s317
      %p319 = scmp.eq.s32.totalorder %s31, 0
      %p320 = por %p318, %p319
      %s322 = sadd.s32 %s321, 1
      %p325 = scmp.eq.s32.totalorder %s25, 1
      %p326 = scmp.ne.s32.totalorder %s321, %s323
      %p327 = scmp.eq.s32.totalorder %s25, 0
      %p328 = por %p326, %p327
      %p329 = scmp.ne.s32.totalorder %s321, %s323
      %p330 = scmp.eq.s32.totalorder %s30, 1
      %p331 = por %p329, %p330
      %p332 = scmp.ne.s32.totalorder %s323, %s324
      %p333 = scmp.eq.s32.totalorder %s30, 0
      %p334 = por %p332, %p333
      %p335 = scmp.ne.s32.totalorder %s323, %s324
      %p336 = scmp.eq.s32.totalorder %s31, 1
      %p337 = por %p335, %p336
      %p339 = scmp.ne.s32.totalorder %s324, %s338
      %p340 = scmp.eq.s32.totalorder %s31, 0
      %p341 = por %p339, %p340
      %s342 = ssub.s32 %s25, %s32
      %p343 = scmp.eq.s32.totalorder %s342, 0
      %s345 = sadd.s32 %s344, 1
      %s346 = scalar_select %p343, %s344, %s345
      %p349 = pneg %p343
      %p350 = scmp.eq.s32.totalorder %s25, 1
      %p351 = por %p349, %p350
      %p352 = scmp.ne.s32.totalorder %s344, %s347
      %p353 = scmp.eq.s32.totalorder %s25, 0
      %p354 = por %p352, %p353
      %p355 = scmp.ne.s32.totalorder %s344, %s347
      %p356 = scmp.eq.s32.totalorder %s30, 1
      %p357 = por %p355, %p356
      %p358 = scmp.ne.s32.totalorder %s347, %s348
      %p359 = scmp.eq.s32.totalorder %s30, 0
      %p360 = por %p358, %p359
      %p361 = scmp.ne.s32.totalorder %s347, %s348
      %p362 = scmp.eq.s32.totalorder %s31, 1
      %p363 = por %p361, %p362
      %p365 = scmp.ne.s32.totalorder %s348, %s364
      %p366 = scmp.eq.s32.totalorder %s31, 0
      %p367 = por %p365, %p366
      %p368 = scmp.le.s32.totalorder 1, %s25
      %p369 = scmp.lt.s32.totalorder %s25, 3
      %p370 = pnand %p368, %p369
      %p371 = pneg %p370
      // Predicated region
      $region9: #{forward.1} parent=5 // pred_check
        _
      $region10: #{forward.1} parent=5 // pred_check_branch
        %373 = sbr.rel (%p370) target = $region12
      $region11: #{forward.1} parent=5 // pred_region
        %s374 = ssub.s32 %s25, 1
        // Predicated region
        $region13: #{forward.1} parent=11 // pred_check
          %p375 = pneg %p124
        $region14: #{forward.1} parent=11 // pred_check_branch
          %377 = sbr.rel (%p375) target = $region16
        $region15: #{forward.1} parent=11 // pred_region
          _
        $region16: #{forward.1} parent=11 // pred_fallthru
          _
        // Predicated region
        $region17: #{forward.1} parent=11 // pred_check
          %p378 = pneg %p145
        $region18: #{forward.1} parent=11 // pred_check_branch
          %380 = sbr.rel (%p378) target = $region20
        $region19: #{forward.1} parent=11 // pred_region
          _
        $region20: #{forward.1} parent=11 // pred_fallthru
          _
        // Predicated region
        $region21: #{forward.1} parent=11 // pred_check
          %p381 = pneg %p166
        $region22: #{forward.1} parent=11 // pred_check_branch
          %383 = sbr.rel (%p381) target = $region24
        $region23: #{forward.1} parent=11 // pred_region
          _
        $region24: #{forward.1} parent=11 // pred_fallthru
          _
        // Predicated region
        $region25: #{forward.1} parent=11 // pred_check
          %p384 = pneg %p187
        $region26: #{forward.1} parent=11 // pred_check_branch
          %386 = sbr.rel (%p384) target = $region28
        $region27: #{forward.1} parent=11 // pred_region
          %388 = vsyncadd [#allocation4], 0
          %s389 = sshll.u32 %s6, 4
          %s390 = int_to_ptr.hbm [resolvable:$true] %s389
          %s391 = sshll.u32 [#allocation3], 4
          %s392 = int_to_ptr.vmem [resolvable:$true] %s391
          %397 = dma.hbm_to_vmem [thread:$0]  %s390, 1024, %s392, [#allocation4], 64, 64, 4
        $region28: #{forward.1} parent=11 // pred_fallthru
          _
        // Predicated region
        $region29: #{forward.1} parent=11 // pred_check
          %p398 = pneg %p208
        $region30: #{forward.1} parent=11 // pred_check_branch
          %400 = sbr.rel (%p398) target = $region32
        $region31: #{forward.1} parent=11 // pred_region
          %402 = vsyncadd [#allocation6], 0
          %s403 = sshll.u32 %s7, 4
          %s404 = int_to_ptr.hbm [resolvable:$true] %s403
          %s405 = sshll.u32 [#allocation5], 4
          %s406 = int_to_ptr.vmem [resolvable:$true] %s405
          %411 = dma.hbm_to_vmem [thread:$0]  %s404, 2048, %s406, [#allocation6], 128, 128, 8
        $region32: #{forward.1} parent=11 // pred_fallthru
          _
        // Predicated region
        $region33: #{forward.1} parent=11 // pred_check
          %p412 = pneg %p229
        $region34: #{forward.1} parent=11 // pred_check_branch
          %414 = sbr.rel (%p412) target = $region36
        $region35: #{forward.1} parent=11 // pred_region
          _
        $region36: #{forward.1} parent=11 // pred_fallthru
          _
        // Predicated region
        $region37: #{forward.1} parent=11 // pred_check
          %p415 = pneg %p250
        $region38: #{forward.1} parent=11 // pred_check_branch
          %417 = sbr.rel (%p415) target = $region40
        $region39: #{forward.1} parent=11 // pred_region
          %419 = vsyncadd [#allocation6], 0
          %s420 = sshll.u32 %s9, 4
          %s421 = int_to_ptr.hbm [resolvable:$true] %s420
          %s422 = sshll.u32 [#allocation7], 4
          %s423 = int_to_ptr.vmem [resolvable:$true] %s422
          %428 = dma.hbm_to_vmem [thread:$0]  %s421, 1024, %s423, [#allocation6], 64, 64, 4
        $region40: #{forward.1} parent=11 // pred_fallthru
          _
        // Predicated region
        $region41: #{forward.1} parent=11 // pred_check
          %p429 = pneg %p271
        $region42: #{forward.1} parent=11 // pred_check_branch
          %431 = sbr.rel (%p429) target = $region44
        $region43: #{forward.1} parent=11 // pred_region
          %433 = vsyncadd [#allocation9], 0
          %s434 = sshll.u32 %s10, 4
          %s435 = int_to_ptr.hbm [resolvable:$true] %s434
          %s436 = sshll.u32 [#allocation8], 4
          %s437 = int_to_ptr.vmem [resolvable:$true] %s436
          %442 = dma.hbm_to_vmem [thread:$0]  %s435, 2048, %s437, [#allocation9], 128, 128, 8
        $region44: #{forward.1} parent=11 // pred_fallthru
          _
        // Predicated region
        $region45: #{forward.1} parent=11 // pred_check
          %p443 = pneg %p292
        $region46: #{forward.1} parent=11 // pred_check_branch
          %445 = sbr.rel (%p443) target = $region48
        $region47: #{forward.1} parent=11 // pred_region
          _
        $region48: #{forward.1} parent=11 // pred_fallthru
          _
        // Predicated region
        $region49: #{forward.1} parent=11 // pred_check
          %p446 = pneg %p313
        $region50: #{forward.1} parent=11 // pred_check_branch
          %448 = sbr.rel (%p446) target = $region52
        $region51: #{forward.1} parent=11 // pred_region
          %450 = vsyncadd [#allocation9], 0
          %s451 = sshll.u32 %s12, 4
          %s452 = int_to_ptr.hbm [resolvable:$true] %s451
          %s453 = sshll.u32 [#allocation10], 4
          %s454 = int_to_ptr.vmem [resolvable:$true] %s453
          %459 = dma.hbm_to_vmem [thread:$0]  %s452, 512, %s454, [#allocation9], 128, 128, 8
        $region52: #{forward.1} parent=11 // pred_fallthru
          _
        // Predicated region
        $region53: #{forward.1} parent=11 // pred_check
          %p460 = pneg %p334
        $region54: #{forward.1} parent=11 // pred_check_branch
          %462 = sbr.rel (%p460) target = $region56
        $region55: #{forward.1} parent=11 // pred_region
          _
        $region56: #{forward.1} parent=11 // pred_fallthru
          _
      $region12: #{forward.1} parent=5 // pred_fallthru
        _
      %p463 = scmp.lt.s32.totalorder %s25, 2
      // Predicated region
      $region57: #{forward.1} parent=5 // pred_check
        %p464 = pneg %p463
      $region58: #{forward.1} parent=5 // pred_check_branch
        %466 = sbr.rel (%p464) target = $region60
      $region59: #{forward.1} parent=5 // pred_region
        // Predicated region
        $region61: #{forward.1} parent=59 // pred_check
          %p467 = pneg %p45
        $region62: #{forward.1} parent=59 // pred_check_branch
          %469 = sbr.rel (%p467) target = $region64
        $region63: #{forward.1} parent=59 // pred_region
          %p470 = scmp.lt.s32.totalorder %s25, 1
          %s471 = scalar_select %p470, %s25, 1
          %s472 = smul.addr %s471, 2
          %s473 = smul.addr %s472, 8
          %s474 = scalar_lea.vmem %s0, %s473
        $region64: #{forward.1} parent=59 // pred_fallthru
          _
        // Predicated region
        $region65: #{forward.1} parent=59 // pred_check
          %p475 = pneg %p71
        $region66: #{forward.1} parent=59 // pred_check_branch
          %477 = sbr.rel (%p475) target = $region68
        $region67: #{forward.1} parent=59 // pred_region
          %p478 = scmp.lt.s32.totalorder %s25, 1
          %s479 = scalar_select %p478, %s25, 1
          %s480 = smul.addr %s479, 2
          %s481 = smul.addr %s480, 8
          %s482 = scalar_lea.vmem %s1, %s481
        $region68: #{forward.1} parent=59 // pred_fallthru
          _
        // Predicated region
        $region69: #{forward.1} parent=59 // pred_check
          %p483 = pneg %p97
        $region70: #{forward.1} parent=59 // pred_check_branch
          %485 = sbr.rel (%p483) target = $region72
        $region71: #{forward.1} parent=59 // pred_region
          %p486 = scmp.lt.s32.totalorder %s25, 1
          %s487 = scalar_select %p486, %s25, 1
          %s488 = smul.addr %s487, 2
          %s489 = scalar_lea.vmem %s2, %s488
        $region72: #{forward.1} parent=59 // pred_fallthru
          _
      $region60: #{forward.1} parent=5 // pred_fallthru
        _
      %p490 = scmp.le.s32.totalorder 1, %s25
      %p491 = scmp.lt.s32.totalorder %s25, 3
      %p492 = pnand %p490, %p491
      %p493 = pneg %p492
      // Predicated region
      $region73: #{forward.1} parent=5 // pred_check
        _
      $region74: #{forward.1} parent=5 // pred_check_branch
        %495 = sbr.rel (%p492) target = $region76
      $region75: #{forward.1} parent=5 // pred_region
        %s496 = ssub.s32 %s25, 1
        // Predicated region
        $region77: #{forward.1} parent=75 // pred_check
          %p497 = pneg %p187
        $region78: #{forward.1} parent=75 // pred_check_branch
          %499 = sbr.rel (%p497) target = $region80
        $region79: #{forward.1} parent=75 // pred_region
          %501 = dma.done [#allocation4], 1024
        $region80: #{forward.1} parent=75 // pred_fallthru
          _
        // Predicated region
        $region81: #{forward.1} parent=75 // pred_check
          %p502 = pneg %p208
        $region82: #{forward.1} parent=75 // pred_check_branch
          %504 = sbr.rel (%p502) target = $region84
        $region83: #{forward.1} parent=75 // pred_region
          %506 = dma.done [#allocation6], 2048
        $region84: #{forward.1} parent=75 // pred_fallthru
          _
        // Predicated region
        $region85: #{forward.1} parent=75 // pred_check
          %p507 = pneg %p250
        $region86: #{forward.1} parent=75 // pred_check_branch
          %509 = sbr.rel (%p507) target = $region88
        $region87: #{forward.1} parent=75 // pred_region
          %511 = dma.done [#allocation6], 1024
        $region88: #{forward.1} parent=75 // pred_fallthru
          _
        // Predicated region
        $region89: #{forward.1} parent=75 // pred_check
          %p512 = pneg %p271
        $region90: #{forward.1} parent=75 // pred_check_branch
          %514 = sbr.rel (%p512) target = $region92
        $region91: #{forward.1} parent=75 // pred_region
          %516 = dma.done [#allocation9], 2048
        $region92: #{forward.1} parent=75 // pred_fallthru
          _
        // Predicated region
        $region93: #{forward.1} parent=75 // pred_check
          %p517 = pneg %p313
        $region94: #{forward.1} parent=75 // pred_check_branch
          %519 = sbr.rel (%p517) target = $region96
        $region95: #{forward.1} parent=75 // pred_region
          %521 = dma.done [#allocation9], 512
        $region96: #{forward.1} parent=75 // pred_fallthru
          _
        %p522 = scmp.lt.s32.totalorder %s30, 1
        %s523 = scalar_select %p522, %s30, 1
        %s524 = smul.addr %s523, 2
        %s525 = smul.addr %s524, 8
        %s526 = scalar_lea.vmem %s0, %s525
        %p527 = pneg %p51
        %p528 = pneg %p48
        %p529 = scmp.lt.s32.totalorder %s30, 1
        %s530 = scalar_select %p529, %s30, 1
        %s531 = smul.addr %s530, 2
        %s532 = smul.addr %s531, 8
        %s533 = scalar_lea.vmem %s1, %s532
        %p534 = pneg %p77
        %p535 = pneg %p74
        %p536 = scmp.lt.s32.totalorder %s30, 1
        %s537 = scalar_select %p536, %s30, 1
        %s538 = smul.addr %s537, 2
        %s539 = scalar_lea.vmem %s2, %s538
        %p540 = pneg %p103
        %p541 = pneg %p100
        %p542 = pneg %p124
        %p543 = pneg %p121
        %p544 = pneg %p145
        %p545 = pneg %p142
        %p546 = pneg %p166
        %p547 = pneg %p163
        %p548 = pneg %p187
        %p549 = pneg %p184
        %p550 = pneg %p208
        %p551 = pneg %p205
        %p552 = pneg %p229
        %p553 = pneg %p226
        %p554 = pneg %p250
        %p555 = pneg %p247
        %p556 = pneg %p271
        %p557 = pneg %p268
        %p558 = pneg %p292
        %p559 = pneg %p289
        %p560 = pneg %p313
        %p561 = pneg %p310
        %p562 = pneg %p334
        %p563 = pneg %p331
        %p564 = pneg %p360
        %p565 = pneg %p357
        %p566 = scmp.lt.s32.totalorder %s30, 1
        %s567 = scalar_select %p566, %s30, 1
        %s568 = smul.addr %s567, 2
        %s569 = scalar_lea.vmem %s14, %s568
        %p570 = scmp.lt.s32.totalorder %s30, 1
        %s571 = scalar_select %p570, %s30, 1
        %s572 = smul.addr %s571, 2
        %s573 = smul.addr %s572, 8
        %s574 = scalar_lea.vmem %s0, %s573
        %p575 = scmp.lt.s32.totalorder %s30, 1
        %s576 = scalar_select %p575, %s30, 1
        %s577 = smul.addr %s576, 2
        %s578 = smul.addr %s577, 8
        %s579 = scalar_lea.vmem %s1, %s578
        %p580 = scmp.lt.s32.totalorder %s30, 1
        %s581 = scalar_select %p580, %s30, 1
        %s582 = smul.addr %s581, 2
        %s583 = scalar_lea.vmem %s2, %s582
        %p584 = scmp.lt.s32.totalorder %s30, 1
        %s585 = scalar_select %p584, %s30, 1
        %s586 = smul.addr %s585, 2
        %s587 = scalar_lea.vmem %s14, %s586
        %v589 = vld [vmem:[%s574] sm:$0xff]
        %v590 = vld [vmem:[%s574 + $0x8] sm:$0xff]
        %v591 = vld [vmem:[%s579] sm:$0xff]
        %v592 = vld [vmem:[%s579 + $0x8] sm:$0xff]
        %vm593 = vcmp.gt.f32.partialorder %v591, 0.0
        %vm594 = vcmp.gt.f32.partialorder %v592, 0.0
        %v595 = vsel %vm593, 0.0, -1e+30
        %v596 = vsel %vm594, 0.0, -1e+30
        %v597 = vpack.c.bf16 %v590, %v589
        %v598 = vld [vmem:[%s3] sm:$0xf]
        %vm599 = vcmask 64512
        %v601 = vsel %vm599, %v597, 0
        %vm603 = vcmask 1043456
        %v605 = vsel %vm603, %v598, 0
        %607 = vmatpush.bf16.msra.mxu0 0
        %608 = vmatpush.bf16.msra.mxu0 0
        %609 = vmatpush.bf16.msra.mxu0 0
        %610 = vmatpush.bf16.msra.mxu0 0
        %611 = vmatpush.bf16.msra.mxu0 0
        %612 = vmatpush.bf16.msra.mxu0 0
        %613 = vmatpush.bf16.msra.mxu0 0
        %614 = vmatpush.bf16.msra.mxu0 %v605
        %615 = vmatmul.bf16.gmra.mxu0 %v601
        %v616 = vpop.f32.mrf.mxu0
        %v617 = vadd.f32 0.0, %v616
        %v618 = vpop.f32.mrf.mxu0
        %v619 = vadd.f32 0.0, %v618
        %620 = vdwg.mxu0
        %v621 = vld [vmem:[%s4] sm:$0xff]
        %v623 = vsel %vm599, %v589, 0
        %v626 = vsel %vm599, %v590, 0
        %628 = vmatpush.msra.mxu0 0.0
        %629 = vmatpush.msra.mxu0 0.0
        %630 = vmatpush.msra.mxu0 0.0
        %631 = vmatpush.msra.mxu0 0.0
        %632 = vmatpush.msra.mxu0 0.0
        %633 = vmatpush.msra.mxu0 0.0
        %634 = vmatpush.msra.mxu0 0.0
        %635 = vmatpush.msra.mxu0 0.0
        %636 = vmatpush.msra.mxu0 0.0
        %637 = vmatpush.msra.mxu0 0.0
        %638 = vmatpush.msra.mxu0 0.0
        %639 = vmatpush.msra.mxu0 0.0
        %640 = vmatpush.msra.mxu0 0.0
        %641 = vmatpush.msra.mxu0 0.0
        %642 = vmatpush.msra.mxu0 0.0
        %643 = vmatpush.msra.mxu0 %v621
        %644 = vmatmul.f32.gmra.mxu0 %v623
        %v645 = vpop.f32.mrf.mxu0
        %v646 = vadd.f32 0.0, %v645
        %647 = vmatmul.f32.gmra.mxu0 %v626
        %v648 = vpop.f32.mrf.mxu0
        %v649 = vadd.f32 0.0, %v648
        %650 = vdwg.mxu0
        %vm651 = vcmask 7168
        %v652 = vsel %vm651, %v646, 1.0
        %v653 = vsel %vm651, %v649, 1.0
        %656 = vrot.lane.b32.xlu0 %v646, 125
        %v657 = vpop.permute.xlu0 %656
        %658 = vrot.lane.b32.xlu0 %v649, 125
        %v659 = vpop.permute.xlu0 %658
        %v662 = vsel %vm651, 1.0, %v657
        %v663 = vsel %vm651, 1.0, %v659
        %vm664 = vcmask 15360
        %v666 = vsel %vm664, %v652, 0
        %v669 = vsel %vm664, %v653, 0
        %v672 = vsel %vm664, %v662, 0
        %v675 = vsel %vm664, %v663, 0
        %677 = vmatpush.xpose.msra.mxu0 0.0
        %678 = vmatpush.xpose.msra.mxu0 0.0
        %679 = vmatpush.xpose.msra.mxu0 0.0
        %680 = vmatpush.xpose.msra.mxu0 0.0
        %681 = vmatpush.xpose.msra.mxu0 0.0
        %682 = vmatpush.xpose.msra.mxu0 0.0
        %683 = vmatpush.xpose.msra.mxu0 0.0
        %684 = vmatpush.xpose.msra.mxu0 0.0
        %685 = vmatpush.xpose.msra.mxu0 0.0
        %686 = vmatpush.xpose.msra.mxu0 0.0
        %687 = vmatpush.xpose.msra.mxu0 0.0
        %688 = vmatpush.xpose.msra.mxu0 0.0
        %689 = vmatpush.xpose.msra.mxu0 0.0
        %690 = vmatpush.xpose.msra.mxu0 0.0
        %691 = vmatpush.xpose.msra.mxu0 %v675
        %692 = vmatpush.xpose.msra.mxu0 %v672
        %693 = vmatmul.f32.gmra.mxu0 %v666
        %v694 = vpop.f32.mrf.mxu0
        %v695 = vadd.f32 0.0, %v694
        %696 = vmatmul.f32.gmra.mxu0 %v669
        %v697 = vpop.f32.mrf.mxu0
        %v698 = vadd.f32 0.0, %v697
        %699 = vdwg.mxu0
        %vm700 = vcmp.ge.f32.partialorder %v695, 0.0
        %vm701 = vcmp.ge.f32.partialorder %v698, 0.0
        %v702 = vmul.f32 %v695, 0.2
        %v703 = vmul.f32 %v698, 0.2
        %v704 = vsel %vm700, %v695, %v702
        %v705 = vsel %vm701, %v698, %v703
        %v706 = vadd.f32 %v704, %v595
        %v707 = vadd.f32 %v705, %v596
        %vm708 = vcmask 130048
        %v709 = vsel %vm708, %v706, -inf
        %710 = vmax.xlane.f32.xlu0 %v709
        %v711 = vpop.xlane.xlu0 %710
        %v712 = vsel %vm708, %v707, -inf
        %713 = vmax.xlane.f32.xlu0 %v712
        %v714 = vpop.xlane.xlu0 %713
        %v715 = vsub.f32 %v706, %v711
        %v716 = vsub.f32 %v707, %v714
        %v717 = vmul.f32 %v715, 1.442695
        %v718 = vpow.pop %v717
        %v719 = vmul.f32 %v716, 1.442695
        %v720 = vpow.pop %v719
        %v721 = vsel %vm708, %v718, 0.0
        %722 = vadd.xlane.f32.xlu0 %v721
        %v723 = vpop.xlane.xlu0 %722
        %v724 = vsel %vm708, %v720, 0.0
        %725 = vadd.xlane.f32.xlu0 %v724
        %v726 = vpop.xlane.xlu0 %725
        %v727 = vrcp.pop %v723
        %v728 = vmul.f32 %v723, %v727
        %v729 = vsub.f32 1.0, %v728
        %v730 = vmul.f32 %v727, %v729
        %v731 = vadd.f32 %v727, %v730
        %vm732 = vweird.f32 %v723
        %vm733 = vweird.f32 %v727
        %vm734 = vmor %vm732, %vm733
        %v735 = vsel %vm734, %v727, %v731
        %v736 = vand.u32 2147483647, %v723
        %vm737 = vcmp.eq.f32.partialorder %v736, 8.507059e+37
        %v738 = vand.u32 %v723, 2147483648
        %v739 = vor.u32 1.1754944e-38, %v738
        %v740 = vsel %vm737, %v739, %v735
        %v741 = vrcp.pop %v726
        %v742 = vmul.f32 %v726, %v741
        %v743 = vsub.f32 1.0, %v742
        %v744 = vmul.f32 %v741, %v743
        %v745 = vadd.f32 %v741, %v744
        %vm746 = vweird.f32 %v726
        %vm747 = vweird.f32 %v741
        %vm748 = vmor %vm746, %vm747
        %v749 = vsel %vm748, %v741, %v745
        %v750 = vand.u32 2147483647, %v726
        %vm751 = vcmp.eq.f32.partialorder %v750, 8.507059e+37
        %v752 = vand.u32 %v726, 2147483648
        %v753 = vor.u32 1.1754944e-38, %v752
        %v754 = vsel %vm751, %v753, %v749
        %v755 = vmul.f32 %v718, %v740
        %v756 = vmul.f32 %v720, %v754
        %v757 = vpack.c.bf16 %v756, %v755
        %v758 = vpack.c.bf16 %v619, %v617
        %v760 = vsel %vm708, %v757, 0
        %762 = vmatpush.bf16.msra.mxu0 0
        %763 = vmatpush.bf16.msra.mxu0 0
        %764 = vmatpush.bf16.msra.mxu0 0
        %765 = vmatpush.bf16.msra.mxu0 0
        %766 = vmatpush.bf16.msra.mxu0 0
        %767 = vmatpush.bf16.msra.mxu0 0
        %768 = vmatpush.bf16.msra.mxu0 0
        %769 = vmatpush.bf16.msra.mxu0 %v758
        %770 = vmatmul.bf16.gmra.mxu0 %v760
        %v771 = vpop.f32.mrf.mxu0
        %v772 = vadd.f32 0.0, %v771
        %v773 = vpop.f32.mrf.mxu0
        %v774 = vadd.f32 0.0, %v773
        %775 = vdwg.mxu0
        %776 = vrot.lane.b32.xlu0 %v646, 127
        %v777 = vpop.permute.xlu0 %776
        %778 = vrot.lane.b32.xlu0 %v649, 127
        %v779 = vpop.permute.xlu0 %778
        %v782 = vsel %vm651, %v777, 1.0
        %v783 = vsel %vm651, %v779, 1.0
        %784 = vrot.lane.b32.xlu0 %v646, 124
        %v785 = vpop.permute.xlu0 %784
        %786 = vrot.lane.b32.xlu0 %v649, 124
        %v787 = vpop.permute.xlu0 %786
        %v790 = vsel %vm651, 1.0, %v785
        %v791 = vsel %vm651, 1.0, %v787
        %v793 = vsel %vm664, %v782, 0
        %v796 = vsel %vm664, %v783, 0
        %v799 = vsel %vm664, %v790, 0
        %v802 = vsel %vm664, %v791, 0
        %804 = vmatpush.xpose.msra.mxu0 0.0
        %805 = vmatpush.xpose.msra.mxu0 0.0
        %806 = vmatpush.xpose.msra.mxu0 0.0
        %807 = vmatpush.xpose.msra.mxu0 0.0
        %808 = vmatpush.xpose.msra.mxu0 0.0
        %809 = vmatpush.xpose.msra.mxu0 0.0
        %810 = vmatpush.xpose.msra.mxu0 0.0
        %811 = vmatpush.xpose.msra.mxu0 0.0
        %812 = vmatpush.xpose.msra.mxu0 0.0
        %813 = vmatpush.xpose.msra.mxu0 0.0
        %814 = vmatpush.xpose.msra.mxu0 0.0
        %815 = vmatpush.xpose.msra.mxu0 0.0
        %816 = vmatpush.xpose.msra.mxu0 0.0
        %817 = vmatpush.xpose.msra.mxu0 0.0
        %818 = vmatpush.xpose.msra.mxu0 %v802
        %819 = vmatpush.xpose.msra.mxu0 %v799
        %820 = vmatmul.f32.gmra.mxu0 %v793
        %v821 = vpop.f32.mrf.mxu0
        %v822 = vadd.f32 0.0, %v821
        %823 = vmatmul.f32.gmra.mxu0 %v796
        %v824 = vpop.f32.mrf.mxu0
        %v825 = vadd.f32 0.0, %v824
        %826 = vdwg.mxu0
        %vm827 = vcmp.ge.f32.partialorder %v822, 0.0
        %vm828 = vcmp.ge.f32.partialorder %v825, 0.0
        %v829 = vmul.f32 %v822, 0.2
        %v830 = vmul.f32 %v825, 0.2
        %v831 = vsel %vm827, %v822, %v829
        %v832 = vsel %vm828, %v825, %v830
        %v833 = vadd.f32 %v831, %v595
        %v834 = vadd.f32 %v832, %v596
        %v835 = vsel %vm708, %v833, -inf
        %836 = vmax.xlane.f32.xlu0 %v835
        %v837 = vpop.xlane.xlu0 %836
        %v838 = vsel %vm708, %v834, -inf
        %839 = vmax.xlane.f32.xlu0 %v838
        %v840 = vpop.xlane.xlu0 %839
        %v841 = vsub.f32 %v833, %v837
        %v842 = vsub.f32 %v834, %v840
        %v843 = vmul.f32 %v841, 1.442695
        %v844 = vpow.pop %v843
        %v845 = vmul.f32 %v842, 1.442695
        %v846 = vpow.pop %v845
        %v847 = vsel %vm708, %v844, 0.0
        %848 = vadd.xlane.f32.xlu0 %v847
        %v849 = vpop.xlane.xlu0 %848
        %v850 = vsel %vm708, %v846, 0.0
        %851 = vadd.xlane.f32.xlu0 %v850
        %v852 = vpop.xlane.xlu0 %851
        %v853 = vrcp.pop %v849
        %v854 = vmul.f32 %v849, %v853
        %v855 = vsub.f32 1.0, %v854
        %v856 = vmul.f32 %v853, %v855
        %v857 = vadd.f32 %v853, %v856
        %vm858 = vweird.f32 %v849
        %vm859 = vweird.f32 %v853
        %vm860 = vmor %vm858, %vm859
        %v861 = vsel %vm860, %v853, %v857
        %v862 = vand.u32 2147483647, %v849
        %vm863 = vcmp.eq.f32.partialorder %v862, 8.507059e+37
        %v864 = vand.u32 %v849, 2147483648
        %v865 = vor.u32 1.1754944e-38, %v864
        %v866 = vsel %vm863, %v865, %v861
        %v867 = vrcp.pop %v852
        %v868 = vmul.f32 %v852, %v867
        %v869 = vsub.f32 1.0, %v868
        %v870 = vmul.f32 %v867, %v869
        %v871 = vadd.f32 %v867, %v870
        %vm872 = vweird.f32 %v852
        %vm873 = vweird.f32 %v867
        %vm874 = vmor %vm872, %vm873
        %v875 = vsel %vm874, %v867, %v871
        %v876 = vand.u32 2147483647, %v852
        %vm877 = vcmp.eq.f32.partialorder %v876, 8.507059e+37
        %v878 = vand.u32 %v852, 2147483648
        %v879 = vor.u32 1.1754944e-38, %v878
        %v880 = vsel %vm877, %v879, %v875
        %v881 = vmul.f32 %v844, %v866
        %v882 = vmul.f32 %v846, %v880
        %v883 = vpack.c.bf16 %v882, %v881
        %885 = vrot.lane.b32.xlu0 %v758, 96
        %v886 = vpop.permute.xlu0 %885
        %v889 = vsel %vm708, %v883, 0
        %891 = vmatpush.bf16.msra.mxu0 0
        %892 = vmatpush.bf16.msra.mxu0 0
        %893 = vmatpush.bf16.msra.mxu0 0
        %894 = vmatpush.bf16.msra.mxu0 0
        %895 = vmatpush.bf16.msra.mxu0 0
        %896 = vmatpush.bf16.msra.mxu0 0
        %897 = vmatpush.bf16.msra.mxu0 0
        %898 = vmatpush.bf16.msra.mxu0 %v886
        %899 = vmatmul.bf16.gmra.mxu0 %v889
        %v900 = vpop.f32.mrf.mxu0
        %v901 = vadd.f32 0.0, %v900
        %v902 = vpop.f32.mrf.mxu0
        %v903 = vadd.f32 0.0, %v902
        %904 = vdwg.mxu0
        %905 = vrot.lane.b32.xlu0 %v646, 126
        %v906 = vpop.permute.xlu0 %905
        %907 = vrot.lane.b32.xlu0 %v649, 126
        %v908 = vpop.permute.xlu0 %907
        %v911 = vsel %vm651, %v906, 1.0
        %v912 = vsel %vm651, %v908, 1.0
        %913 = vrot.lane.b32.xlu0 %v646, 123
        %v914 = vpop.permute.xlu0 %913
        %915 = vrot.lane.b32.xlu0 %v649, 123
        %v916 = vpop.permute.xlu0 %915
        %v919 = vsel %vm651, 1.0, %v914
        %v920 = vsel %vm651, 1.0, %v916
        %v922 = vsel %vm664, %v911, 0
        %v925 = vsel %vm664, %v912, 0
        %v928 = vsel %vm664, %v919, 0
        %v931 = vsel %vm664, %v920, 0
        %933 = vmatpush.xpose.msra.mxu0 0.0
        %934 = vmatpush.xpose.msra.mxu0 0.0
        %935 = vmatpush.xpose.msra.mxu0 0.0
        %936 = vmatpush.xpose.msra.mxu0 0.0
        %937 = vmatpush.xpose.msra.mxu0 0.0
        %938 = vmatpush.xpose.msra.mxu0 0.0
        %939 = vmatpush.xpose.msra.mxu0 0.0
        %940 = vmatpush.xpose.msra.mxu0 0.0
        %941 = vmatpush.xpose.msra.mxu0 0.0
        %942 = vmatpush.xpose.msra.mxu0 0.0
        %943 = vmatpush.xpose.msra.mxu0 0.0
        %944 = vmatpush.xpose.msra.mxu0 0.0
        %945 = vmatpush.xpose.msra.mxu0 0.0
        %946 = vmatpush.xpose.msra.mxu0 0.0
        %947 = vmatpush.xpose.msra.mxu0 %v931
        %948 = vmatpush.xpose.msra.mxu0 %v928
        %949 = vmatmul.f32.gmra.mxu0 %v922
        %v950 = vpop.f32.mrf.mxu0
        %v951 = vadd.f32 0.0, %v950
        %952 = vmatmul.f32.gmra.mxu0 %v925
        %v953 = vpop.f32.mrf.mxu0
        %v954 = vadd.f32 0.0, %v953
        %955 = vdwg.mxu0
        %vm956 = vcmp.ge.f32.partialorder %v951, 0.0
        %vm957 = vcmp.ge.f32.partialorder %v954, 0.0
        %v958 = vmul.f32 %v951, 0.2
        %v959 = vmul.f32 %v954, 0.2
        %v960 = vsel %vm956, %v951, %v958
        %v961 = vsel %vm957, %v954, %v959
        %v962 = vadd.f32 %v960, %v595
        %v963 = vadd.f32 %v961, %v596
        %v964 = vsel %vm708, %v962, -inf
        %965 = vmax.xlane.f32.xlu0 %v964
        %v966 = vpop.xlane.xlu0 %965
        %v967 = vsel %vm708, %v963, -inf
        %968 = vmax.xlane.f32.xlu0 %v967
        %v969 = vpop.xlane.xlu0 %968
        %v970 = vsub.f32 %v962, %v966
        %v971 = vsub.f32 %v963, %v969
        %v972 = vmul.f32 %v970, 1.442695
        %v973 = vpow.pop %v972
        %v974 = vmul.f32 %v971, 1.442695
        %v975 = vpow.pop %v974
        %v976 = vsel %vm708, %v973, 0.0
        %977 = vadd.xlane.f32.xlu0 %v976
        %v978 = vpop.xlane.xlu0 %977
        %v979 = vsel %vm708, %v975, 0.0
        %980 = vadd.xlane.f32.xlu0 %v979
        %v981 = vpop.xlane.xlu0 %980
        %v982 = vrcp.pop %v978
        %v983 = vmul.f32 %v978, %v982
        %v984 = vsub.f32 1.0, %v983
        %v985 = vmul.f32 %v982, %v984
        %v986 = vadd.f32 %v982, %v985
        %vm987 = vweird.f32 %v978
        %vm988 = vweird.f32 %v982
        %vm989 = vmor %vm987, %vm988
        %v990 = vsel %vm989, %v982, %v986
        %v991 = vand.u32 2147483647, %v978
        %vm992 = vcmp.eq.f32.partialorder %v991, 8.507059e+37
        %v993 = vand.u32 %v978, 2147483648
        %v994 = vor.u32 1.1754944e-38, %v993
        %v995 = vsel %vm992, %v994, %v990
        %v996 = vrcp.pop %v981
        %v997 = vmul.f32 %v981, %v996
        %v998 = vsub.f32 1.0, %v997
        %v999 = vmul.f32 %v996, %v998
        %v1000 = vadd.f32 %v996, %v999
        %vm1001 = vweird.f32 %v981
        %vm1002 = vweird.f32 %v996
        %vm1003 = vmor %vm1001, %vm1002
        %v1004 = vsel %vm1003, %v996, %v1000
        %v1005 = vand.u32 2147483647, %v981
        %vm1006 = vcmp.eq.f32.partialorder %v1005, 8.507059e+37
        %v1007 = vand.u32 %v981, 2147483648
        %v1008 = vor.u32 1.1754944e-38, %v1007
        %v1009 = vsel %vm1006, %v1008, %v1004
        %v1010 = vmul.f32 %v973, %v995
        %v1011 = vmul.f32 %v975, %v1009
        %v1012 = vpack.c.bf16 %v1011, %v1010
        %1013 = vrot.lane.b32.xlu0 %v758, 64
        %v1014 = vpop.permute.xlu0 %1013
        %v1017 = vsel %vm708, %v1012, 0
        %1019 = vmatpush.bf16.msra.mxu0 0
        %1020 = vmatpush.bf16.msra.mxu0 0
        %1021 = vmatpush.bf16.msra.mxu0 0
        %1022 = vmatpush.bf16.msra.mxu0 0
        %1023 = vmatpush.bf16.msra.mxu0 0
        %1024 = vmatpush.bf16.msra.mxu0 0
        %1025 = vmatpush.bf16.msra.mxu0 0
        %1026 = vmatpush.bf16.msra.mxu0 %v1014
        %1027 = vmatmul.bf16.gmra.mxu0 %v1017
        %v1028 = vpop.f32.mrf.mxu0
        %v1029 = vadd.f32 0.0, %v1028
        %v1030 = vpop.f32.mrf.mxu0
        %v1031 = vadd.f32 0.0, %v1030
        %1032 = vdwg.mxu0
        %v1033 = vsel %vm651, %v657, 1.0
        %v1034 = vsel %vm651, %v659, 1.0
        %1035 = vrot.lane.b32.xlu0 %v646, 122
        %v1036 = vpop.permute.xlu0 %1035
        %1037 = vrot.lane.b32.xlu0 %v649, 122
        %v1038 = vpop.permute.xlu0 %1037
        %v1041 = vsel %vm651, 1.0, %v1036
        %v1042 = vsel %vm651, 1.0, %v1038
        %v1044 = vsel %vm664, %v1033, 0
        %v1047 = vsel %vm664, %v1034, 0
        %v1050 = vsel %vm664, %v1041, 0
        %v1053 = vsel %vm664, %v1042, 0
        %1055 = vmatpush.xpose.msra.mxu0 0.0
        %1056 = vmatpush.xpose.msra.mxu0 0.0
        %1057 = vmatpush.xpose.msra.mxu0 0.0
        %1058 = vmatpush.xpose.msra.mxu0 0.0
        %1059 = vmatpush.xpose.msra.mxu0 0.0
        %1060 = vmatpush.xpose.msra.mxu0 0.0
        %1061 = vmatpush.xpose.msra.mxu0 0.0
        %1062 = vmatpush.xpose.msra.mxu0 0.0
        %1063 = vmatpush.xpose.msra.mxu0 0.0
        %1064 = vmatpush.xpose.msra.mxu0 0.0
        %1065 = vmatpush.xpose.msra.mxu0 0.0
        %1066 = vmatpush.xpose.msra.mxu0 0.0
        %1067 = vmatpush.xpose.msra.mxu0 0.0
        %1068 = vmatpush.xpose.msra.mxu0 0.0
        %1069 = vmatpush.xpose.msra.mxu0 %v1053
        %1070 = vmatpush.xpose.msra.mxu0 %v1050
        %1071 = vmatmul.f32.gmra.mxu0 %v1044
        %v1072 = vpop.f32.mrf.mxu0
        %v1073 = vadd.f32 0.0, %v1072
        %1074 = vmatmul.f32.gmra.mxu0 %v1047
        %v1075 = vpop.f32.mrf.mxu0
        %v1076 = vadd.f32 0.0, %v1075
        %1077 = vdwg.mxu0
        %vm1078 = vcmp.ge.f32.partialorder %v1073, 0.0
        %vm1079 = vcmp.ge.f32.partialorder %v1076, 0.0
        %v1080 = vmul.f32 %v1073, 0.2
        %v1081 = vmul.f32 %v1076, 0.2
        %v1082 = vsel %vm1078, %v1073, %v1080
        %v1083 = vsel %vm1079, %v1076, %v1081
        %v1084 = vadd.f32 %v1082, %v595
        %v1085 = vadd.f32 %v1083, %v596
        %v1086 = vsel %vm708, %v1084, -inf
        %1087 = vmax.xlane.f32.xlu0 %v1086
        %v1088 = vpop.xlane.xlu0 %1087
        %v1089 = vsel %vm708, %v1085, -inf
        %1090 = vmax.xlane.f32.xlu0 %v1089
        %v1091 = vpop.xlane.xlu0 %1090
        %v1092 = vsub.f32 %v1084, %v1088
        %v1093 = vsub.f32 %v1085, %v1091
        %v1094 = vmul.f32 %v1092, 1.442695
        %v1095 = vpow.pop %v1094
        %v1096 = vmul.f32 %v1093, 1.442695
        %v1097 = vpow.pop %v1096
        %v1098 = vsel %vm708, %v1095, 0.0
        %1099 = vadd.xlane.f32.xlu0 %v1098
        %v1100 = vpop.xlane.xlu0 %1099
        %v1101 = vsel %vm708, %v1097, 0.0
        %1102 = vadd.xlane.f32.xlu0 %v1101
        %v1103 = vpop.xlane.xlu0 %1102
        %v1104 = vrcp.pop %v1100
        %v1105 = vmul.f32 %v1100, %v1104
        %v1106 = vsub.f32 1.0, %v1105
        %v1107 = vmul.f32 %v1104, %v1106
        %v1108 = vadd.f32 %v1104, %v1107
        %vm1109 = vweird.f32 %v1100
        %vm1110 = vweird.f32 %v1104
        %vm1111 = vmor %vm1109, %vm1110
        %v1112 = vsel %vm1111, %v1104, %v1108
        %v1113 = vand.u32 2147483647, %v1100
        %vm1114 = vcmp.eq.f32.partialorder %v1113, 8.507059e+37
        %v1115 = vand.u32 %v1100, 2147483648
        %v1116 = vor.u32 1.1754944e-38, %v1115
        %v1117 = vsel %vm1114, %v1116, %v1112
        %v1118 = vrcp.pop %v1103
        %v1119 = vmul.f32 %v1103, %v1118
        %v1120 = vsub.f32 1.0, %v1119
        %v1121 = vmul.f32 %v1118, %v1120
        %v1122 = vadd.f32 %v1118, %v1121
        %vm1123 = vweird.f32 %v1103
        %vm1124 = vweird.f32 %v1118
        %vm1125 = vmor %vm1123, %vm1124
        %v1126 = vsel %vm1125, %v1118, %v1122
        %v1127 = vand.u32 2147483647, %v1103
        %vm1128 = vcmp.eq.f32.partialorder %v1127, 8.507059e+37
        %v1129 = vand.u32 %v1103, 2147483648
        %v1130 = vor.u32 1.1754944e-38, %v1129
        %v1131 = vsel %vm1128, %v1130, %v1126
        %v1132 = vmul.f32 %v1095, %v1117
        %v1133 = vmul.f32 %v1097, %v1131
        %v1134 = vpack.c.bf16 %v1133, %v1132
        %1135 = vrot.lane.b32.xlu0 %v758, 32
        %v1136 = vpop.permute.xlu0 %1135
        %v1139 = vsel %vm708, %v1134, 0
        %1141 = vmatpush.bf16.msra.mxu0 0
        %1142 = vmatpush.bf16.msra.mxu0 0
        %1143 = vmatpush.bf16.msra.mxu0 0
        %1144 = vmatpush.bf16.msra.mxu0 0
        %1145 = vmatpush.bf16.msra.mxu0 0
        %1146 = vmatpush.bf16.msra.mxu0 0
        %1147 = vmatpush.bf16.msra.mxu0 0
        %1148 = vmatpush.bf16.msra.mxu0 %v1136
        %1149 = vmatmul.bf16.gmra.mxu0 %v1139
        %v1150 = vpop.f32.mrf.mxu0
        %v1151 = vadd.f32 0.0, %v1150
        %v1152 = vpop.f32.mrf.mxu0
        %v1153 = vadd.f32 0.0, %v1152
        %1154 = vdwg.mxu0
        %1157 = vrot.lane.b32.xlu0 %v901, 32
        %v1158 = vpop.permute.xlu0 %1157
        %1159 = vrot.lane.b32.xlu0 %v903, 32
        %v1160 = vpop.permute.xlu0 %1159
        %1165 = vrot.lane.b32.xlu0 %v1029, 64
        %v1166 = vpop.permute.xlu0 %1165
        %1167 = vrot.lane.b32.xlu0 %v1031, 64
        %v1168 = vpop.permute.xlu0 %1167
        %1173 = vrot.lane.b32.xlu0 %v1151, 96
        %v1174 = vpop.permute.xlu0 %1173
        %1175 = vrot.lane.b32.xlu0 %v1153, 96
        %v1176 = vpop.permute.xlu0 %1175
        %vm1179 = vcmask 261120
        %v1180 = vsel %vm1179, %v772, %v1158
        %v1181 = vsel %vm1179, %v774, %v1160
        %vm1182 = vcmask 523264
        %v1183 = vsel %vm1182, %v1180, %v1166
        %v1184 = vsel %vm1182, %v1181, %v1168
        %vm1185 = vcmask 785408
        %v1186 = vsel %vm1185, %v1183, %v1174
        %v1187 = vsel %vm1185, %v1184, %v1176
        %v1188 = vld [vmem:[%s5] sm:$0x1]
        %v1190 = vperm.slane %v1188, 0
        %v1192 = vadd.f32 %v1186, %v1190
        %v1193 = vadd.f32 %v1187, %v1190
        %vm1194 = vcmp.gt.f32.partialorder %v1192, 0.0
        %vm1195 = vcmp.gt.f32.partialorder %v1193, 0.0
        %v1196 = vmin.f32 %v1192, 0.0
        %v1197 = vmin.f32 %v1193, 0.0
        %v1198 = vmul.f32 %v1196, 1.442695
        %v1199 = vpow.pop %v1198
        %v1200 = vmul.f32 %v1197, 1.442695
        %v1201 = vpow.pop %v1200
        %v1202 = vsub.f32 %v1199, 1.0
        %v1203 = vsub.f32 %v1201, 1.0
        %v1204 = vsel %vm1194, %v1192, %v1202
        %v1205 = vsel %vm1195, %v1193, %v1203
        %v1206 = vpack.c.bf16 %v1205, %v1204
        %v1207 = vld [vmem:[#allocation3] sm:$0xf]
        %v1208 = vld [vmem:[#allocation3 + $0x4] sm:$0xf]
        %v1209 = vld [vmem:[#allocation3 + $0x8] sm:$0xf]
        %v1210 = vld [vmem:[#allocation3 + $0xc] sm:$0xf]
        %v1211 = vld [vmem:[#allocation3 + $0x10] sm:$0xf]
        %v1212 = vld [vmem:[#allocation3 + $0x14] sm:$0xf]
        %v1213 = vld [vmem:[#allocation3 + $0x18] sm:$0xf]
        %v1214 = vld [vmem:[#allocation3 + $0x1c] sm:$0xf]
        %v1215 = vld [vmem:[#allocation3 + $0x20] sm:$0xf]
        %v1216 = vld [vmem:[#allocation3 + $0x24] sm:$0xf]
        %v1217 = vld [vmem:[#allocation3 + $0x28] sm:$0xf]
        %v1218 = vld [vmem:[#allocation3 + $0x2c] sm:$0xf]
        %v1219 = vld [vmem:[#allocation3 + $0x30] sm:$0xf]
        %v1220 = vld [vmem:[#allocation3 + $0x34] sm:$0xf]
        %v1221 = vld [vmem:[#allocation3 + $0x38] sm:$0xf]
        %v1222 = vld [vmem:[#allocation3 + $0x3c] sm:$0xf]
        %v1239 = vunpack.c.l.b16 %v1207
        %v1240 = vunpack.c.l.b16 %v1208
        %v1241 = vunpack.c.l.b16 %v1209
        %v1242 = vunpack.c.l.b16 %v1210
        %v1243 = vunpack.c.l.b16 %v1211
        %v1244 = vunpack.c.l.b16 %v1212
        %v1245 = vunpack.c.l.b16 %v1213
        %v1246 = vunpack.c.l.b16 %v1214
        %v1247 = vunpack.c.l.b16 %v1215
        %v1248 = vunpack.c.l.b16 %v1216
        %v1249 = vunpack.c.l.b16 %v1217
        %v1250 = vunpack.c.l.b16 %v1218
        %v1251 = vunpack.c.l.b16 %v1219
        %v1252 = vunpack.c.l.b16 %v1220
        %v1253 = vunpack.c.l.b16 %v1221
        %v1254 = vunpack.c.l.b16 %v1222
        %v1255 = vpack.c.b16 %v1240, %v1239
        %v1256 = vpack.c.b16 %v1242, %v1241
        %v1257 = vpack.c.b16 %v1244, %v1243
        %v1258 = vpack.c.b16 %v1246, %v1245
        %v1259 = vpack.c.b16 %v1248, %v1247
        %v1260 = vpack.c.b16 %v1250, %v1249
        %v1261 = vpack.c.b16 %v1252, %v1251
        %v1262 = vpack.c.b16 %v1254, %v1253
        %1271 = vmatpush.bf16.msra.mxu0 %v1262
        %1272 = vmatpush.bf16.msra.mxu0 %v1261
        %1273 = vmatpush.bf16.msra.mxu0 %v1260
        %1274 = vmatpush.bf16.msra.mxu0 %v1259
        %1275 = vmatpush.bf16.msra.mxu0 %v1258
        %1276 = vmatpush.bf16.msra.mxu0 %v1257
        %1277 = vmatpush.bf16.msra.mxu0 %v1256
        %1278 = vmatpush.bf16.msra.mxu0 %v1255
        %1279 = vmatmul.bf16.gmra.mxu0 %v1206
        %v1280 = vpop.f32.mrf.mxu0
        %v1281 = vadd.f32 0.0, %v1280
        %v1282 = vpop.f32.mrf.mxu0
        %v1283 = vadd.f32 0.0, %v1282
        %1284 = vdwg.mxu0
        %v1285 = vld [vmem:[#allocation5] sm:$0xff]
        %v1286 = vld [vmem:[#allocation5 + $0x8] sm:$0xff]
        %v1287 = vld [vmem:[#allocation5 + $0x10] sm:$0xff]
        %v1288 = vld [vmem:[#allocation5 + $0x18] sm:$0xff]
        %v1289 = vld [vmem:[#allocation5 + $0x20] sm:$0xff]
        %v1290 = vld [vmem:[#allocation5 + $0x28] sm:$0xff]
        %v1291 = vld [vmem:[#allocation5 + $0x30] sm:$0xff]
        %v1292 = vld [vmem:[#allocation5 + $0x38] sm:$0xff]
        %v1293 = vld [vmem:[#allocation5 + $0x40] sm:$0xff]
        %v1294 = vld [vmem:[#allocation5 + $0x48] sm:$0xff]
        %v1295 = vld [vmem:[#allocation5 + $0x50] sm:$0xff]
        %v1296 = vld [vmem:[#allocation5 + $0x58] sm:$0xff]
        %v1297 = vld [vmem:[#allocation5 + $0x60] sm:$0xff]
        %v1298 = vld [vmem:[#allocation5 + $0x68] sm:$0xff]
        %v1299 = vld [vmem:[#allocation5 + $0x70] sm:$0xff]
        %v1300 = vld [vmem:[#allocation5 + $0x78] sm:$0xff]
        %1301 = vmatpush.msra.mxu0 %v1300
        %1302 = vmatpush.msra.mxu0 %v1299
        %1303 = vmatpush.msra.mxu0 %v1298
        %1304 = vmatpush.msra.mxu0 %v1297
        %1305 = vmatpush.msra.mxu0 %v1296
        %1306 = vmatpush.msra.mxu0 %v1295
        %1307 = vmatpush.msra.mxu0 %v1294
        %1308 = vmatpush.msra.mxu0 %v1293
        %1309 = vmatpush.msra.mxu0 %v1292
        %1310 = vmatpush.msra.mxu0 %v1291
        %1311 = vmatpush.msra.mxu0 %v1290
        %1312 = vmatpush.msra.mxu0 %v1289
        %1313 = vmatpush.msra.mxu0 %v1288
        %1314 = vmatpush.msra.mxu0 %v1287
        %1315 = vmatpush.msra.mxu0 %v1286
        %1316 = vmatpush.msra.mxu0 %v1285
        %1317 = vmatmul.f32.gmra.mxu0 %v1204
        %v1318 = vpop.f32.mrf.mxu0
        %v1319 = vadd.f32 0.0, %v1318
        %1320 = vmatmul.f32.gmra.mxu0 %v1205
        %v1321 = vpop.f32.mrf.mxu0
        %v1322 = vadd.f32 0.0, %v1321
        %1323 = vdwg.mxu0
        %v1324 = vsel %vm651, %v1319, 1.0
        %v1325 = vsel %vm651, %v1322, 1.0
        %1328 = vrot.lane.b32.xlu0 %v1319, 125
        %v1329 = vpop.permute.xlu0 %1328
        %1330 = vrot.lane.b32.xlu0 %v1322, 125
        %v1331 = vpop.permute.xlu0 %1330
        %v1334 = vsel %vm651, 1.0, %v1329
        %v1335 = vsel %vm651, 1.0, %v1331
        %v1337 = vsel %vm664, %v1324, 0
        %v1340 = vsel %vm664, %v1325, 0
        %v1343 = vsel %vm664, %v1334, 0
        %v1346 = vsel %vm664, %v1335, 0
        %1348 = vmatpush.xpose.msra.mxu0 0.0
        %1349 = vmatpush.xpose.msra.mxu0 0.0
        %1350 = vmatpush.xpose.msra.mxu0 0.0
        %1351 = vmatpush.xpose.msra.mxu0 0.0
        %1352 = vmatpush.xpose.msra.mxu0 0.0
        %1353 = vmatpush.xpose.msra.mxu0 0.0
        %1354 = vmatpush.xpose.msra.mxu0 0.0
        %1355 = vmatpush.xpose.msra.mxu0 0.0
        %1356 = vmatpush.xpose.msra.mxu0 0.0
        %1357 = vmatpush.xpose.msra.mxu0 0.0
        %1358 = vmatpush.xpose.msra.mxu0 0.0
        %1359 = vmatpush.xpose.msra.mxu0 0.0
        %1360 = vmatpush.xpose.msra.mxu0 0.0
        %1361 = vmatpush.xpose.msra.mxu0 0.0
        %1362 = vmatpush.xpose.msra.mxu0 %v1346
        %1363 = vmatpush.xpose.msra.mxu0 %v1343
        %1364 = vmatmul.f32.gmra.mxu0 %v1337
        %v1365 = vpop.f32.mrf.mxu0
        %v1366 = vadd.f32 0.0, %v1365
        %1367 = vmatmul.f32.gmra.mxu0 %v1340
        %v1368 = vpop.f32.mrf.mxu0
        %v1369 = vadd.f32 0.0, %v1368
        %1370 = vdwg.mxu0
        %vm1371 = vcmp.ge.f32.partialorder %v1366, 0.0
        %vm1372 = vcmp.ge.f32.partialorder %v1369, 0.0
        %v1373 = vmul.f32 %v1366, 0.2
        %v1374 = vmul.f32 %v1369, 0.2
        %v1375 = vsel %vm1371, %v1366, %v1373
        %v1376 = vsel %vm1372, %v1369, %v1374
        %v1377 = vadd.f32 %v1375, %v595
        %v1378 = vadd.f32 %v1376, %v596
        %v1379 = vsel %vm708, %v1377, -inf
        %1380 = vmax.xlane.f32.xlu0 %v1379
        %v1381 = vpop.xlane.xlu0 %1380
        %v1382 = vsel %vm708, %v1378, -inf
        %1383 = vmax.xlane.f32.xlu0 %v1382
        %v1384 = vpop.xlane.xlu0 %1383
        %v1385 = vsub.f32 %v1377, %v1381
        %v1386 = vsub.f32 %v1378, %v1384
        %v1387 = vmul.f32 %v1385, 1.442695
        %v1388 = vpow.pop %v1387
        %v1389 = vmul.f32 %v1386, 1.442695
        %v1390 = vpow.pop %v1389
        %v1391 = vsel %vm708, %v1388, 0.0
        %1392 = vadd.xlane.f32.xlu0 %v1391
        %v1393 = vpop.xlane.xlu0 %1392
        %v1394 = vsel %vm708, %v1390, 0.0
        %1395 = vadd.xlane.f32.xlu0 %v1394
        %v1396 = vpop.xlane.xlu0 %1395
        %v1397 = vrcp.pop %v1393
        %v1398 = vmul.f32 %v1393, %v1397
        %v1399 = vsub.f32 1.0, %v1398
        %v1400 = vmul.f32 %v1397, %v1399
        %v1401 = vadd.f32 %v1397, %v1400
        %vm1402 = vweird.f32 %v1393
        %vm1403 = vweird.f32 %v1397
        %vm1404 = vmor %vm1402, %vm1403
        %v1405 = vsel %vm1404, %v1397, %v1401
        %v1406 = vand.u32 2147483647, %v1393
        %vm1407 = vcmp.eq.f32.partialorder %v1406, 8.507059e+37
        %v1408 = vand.u32 %v1393, 2147483648
        %v1409 = vor.u32 1.1754944e-38, %v1408
        %v1410 = vsel %vm1407, %v1409, %v1405
        %v1411 = vrcp.pop %v1396
        %v1412 = vmul.f32 %v1396, %v1411
        %v1413 = vsub.f32 1.0, %v1412
        %v1414 = vmul.f32 %v1411, %v1413
        %v1415 = vadd.f32 %v1411, %v1414
        %vm1416 = vweird.f32 %v1396
        %vm1417 = vweird.f32 %v1411
        %vm1418 = vmor %vm1416, %vm1417
        %v1419 = vsel %vm1418, %v1411, %v1415
        %v1420 = vand.u32 2147483647, %v1396
        %vm1421 = vcmp.eq.f32.partialorder %v1420, 8.507059e+37
        %v1422 = vand.u32 %v1396, 2147483648
        %v1423 = vor.u32 1.1754944e-38, %v1422
        %v1424 = vsel %vm1421, %v1423, %v1419
        %v1425 = vmul.f32 %v1388, %v1410
        %v1426 = vmul.f32 %v1390, %v1424
        %v1427 = vpack.c.bf16 %v1426, %v1425
        %v1428 = vpack.c.bf16 %v1283, %v1281
        %v1430 = vsel %vm708, %v1427, 0
        %1432 = vmatpush.bf16.msra.mxu0 0
        %1433 = vmatpush.bf16.msra.mxu0 0
        %1434 = vmatpush.bf16.msra.mxu0 0
        %1435 = vmatpush.bf16.msra.mxu0 0
        %1436 = vmatpush.bf16.msra.mxu0 0
        %1437 = vmatpush.bf16.msra.mxu0 0
        %1438 = vmatpush.bf16.msra.mxu0 0
        %1439 = vmatpush.bf16.msra.mxu0 %v1428
        %1440 = vmatmul.bf16.gmra.mxu0 %v1430
        %v1441 = vpop.f32.mrf.mxu0
        %v1442 = vadd.f32 0.0, %v1441
        %v1443 = vpop.f32.mrf.mxu0
        %v1444 = vadd.f32 0.0, %v1443
        %1445 = vdwg.mxu0
        %1446 = vrot.lane.b32.xlu0 %v1319, 127
        %v1447 = vpop.permute.xlu0 %1446
        %1448 = vrot.lane.b32.xlu0 %v1322, 127
        %v1449 = vpop.permute.xlu0 %1448
        %v1452 = vsel %vm651, %v1447, 1.0
        %v1453 = vsel %vm651, %v1449, 1.0
        %1454 = vrot.lane.b32.xlu0 %v1319, 124
        %v1455 = vpop.permute.xlu0 %1454
        %1456 = vrot.lane.b32.xlu0 %v1322, 124
        %v1457 = vpop.permute.xlu0 %1456
        %v1460 = vsel %vm651, 1.0, %v1455
        %v1461 = vsel %vm651, 1.0, %v1457
        %v1463 = vsel %vm664, %v1452, 0
        %v1466 = vsel %vm664, %v1453, 0
        %v1469 = vsel %vm664, %v1460, 0
        %v1472 = vsel %vm664, %v1461, 0
        %1474 = vmatpush.xpose.msra.mxu0 0.0
        %1475 = vmatpush.xpose.msra.mxu0 0.0
        %1476 = vmatpush.xpose.msra.mxu0 0.0
        %1477 = vmatpush.xpose.msra.mxu0 0.0
        %1478 = vmatpush.xpose.msra.mxu0 0.0
        %1479 = vmatpush.xpose.msra.mxu0 0.0
        %1480 = vmatpush.xpose.msra.mxu0 0.0
        %1481 = vmatpush.xpose.msra.mxu0 0.0
        %1482 = vmatpush.xpose.msra.mxu0 0.0
        %1483 = vmatpush.xpose.msra.mxu0 0.0
        %1484 = vmatpush.xpose.msra.mxu0 0.0
        %1485 = vmatpush.xpose.msra.mxu0 0.0
        %1486 = vmatpush.xpose.msra.mxu0 0.0
        %1487 = vmatpush.xpose.msra.mxu0 0.0
        %1488 = vmatpush.xpose.msra.mxu0 %v1472
        %1489 = vmatpush.xpose.msra.mxu0 %v1469
        %1490 = vmatmul.f32.gmra.mxu0 %v1463
        %v1491 = vpop.f32.mrf.mxu0
        %v1492 = vadd.f32 0.0, %v1491
        %1493 = vmatmul.f32.gmra.mxu0 %v1466
        %v1494 = vpop.f32.mrf.mxu0
        %v1495 = vadd.f32 0.0, %v1494
        %1496 = vdwg.mxu0
        %vm1497 = vcmp.ge.f32.partialorder %v1492, 0.0
        %vm1498 = vcmp.ge.f32.partialorder %v1495, 0.0
        %v1499 = vmul.f32 %v1492, 0.2
        %v1500 = vmul.f32 %v1495, 0.2
        %v1501 = vsel %vm1497, %v1492, %v1499
        %v1502 = vsel %vm1498, %v1495, %v1500
        %v1503 = vadd.f32 %v1501, %v595
        %v1504 = vadd.f32 %v1502, %v596
        %v1505 = vsel %vm708, %v1503, -inf
        %1506 = vmax.xlane.f32.xlu0 %v1505
        %v1507 = vpop.xlane.xlu0 %1506
        %v1508 = vsel %vm708, %v1504, -inf
        %1509 = vmax.xlane.f32.xlu0 %v1508
        %v1510 = vpop.xlane.xlu0 %1509
        %v1511 = vsub.f32 %v1503, %v1507
        %v1512 = vsub.f32 %v1504, %v1510
        %v1513 = vmul.f32 %v1511, 1.442695
        %v1514 = vpow.pop %v1513
        %v1515 = vmul.f32 %v1512, 1.442695
        %v1516 = vpow.pop %v1515
        %v1517 = vsel %vm708, %v1514, 0.0
        %1518 = vadd.xlane.f32.xlu0 %v1517
        %v1519 = vpop.xlane.xlu0 %1518
        %v1520 = vsel %vm708, %v1516, 0.0
        %1521 = vadd.xlane.f32.xlu0 %v1520
        %v1522 = vpop.xlane.xlu0 %1521
        %v1523 = vrcp.pop %v1519
        %v1524 = vmul.f32 %v1519, %v1523
        %v1525 = vsub.f32 1.0, %v1524
        %v1526 = vmul.f32 %v1523, %v1525
        %v1527 = vadd.f32 %v1523, %v1526
        %vm1528 = vweird.f32 %v1519
        %vm1529 = vweird.f32 %v1523
        %vm1530 = vmor %vm1528, %vm1529
        %v1531 = vsel %vm1530, %v1523, %v1527
        %v1532 = vand.u32 2147483647, %v1519
        %vm1533 = vcmp.eq.f32.partialorder %v1532, 8.507059e+37
        %v1534 = vand.u32 %v1519, 2147483648
        %v1535 = vor.u32 1.1754944e-38, %v1534
        %v1536 = vsel %vm1533, %v1535, %v1531
        %v1537 = vrcp.pop %v1522
        %v1538 = vmul.f32 %v1522, %v1537
        %v1539 = vsub.f32 1.0, %v1538
        %v1540 = vmul.f32 %v1537, %v1539
        %v1541 = vadd.f32 %v1537, %v1540
        %vm1542 = vweird.f32 %v1522
        %vm1543 = vweird.f32 %v1537
        %vm1544 = vmor %vm1542, %vm1543
        %v1545 = vsel %vm1544, %v1537, %v1541
        %v1546 = vand.u32 2147483647, %v1522
        %vm1547 = vcmp.eq.f32.partialorder %v1546, 8.507059e+37
        %v1548 = vand.u32 %v1522, 2147483648
        %v1549 = vor.u32 1.1754944e-38, %v1548
        %v1550 = vsel %vm1547, %v1549, %v1545
        %v1551 = vmul.f32 %v1514, %v1536
        %v1552 = vmul.f32 %v1516, %v1550
        %v1553 = vpack.c.bf16 %v1552, %v1551
        %1555 = vrot.lane.b32.xlu0 %v1428, 96
        %v1556 = vpop.permute.xlu0 %1555
        %v1559 = vsel %vm708, %v1553, 0
        %1561 = vmatpush.bf16.msra.mxu0 0
        %1562 = vmatpush.bf16.msra.mxu0 0
        %1563 = vmatpush.bf16.msra.mxu0 0
        %1564 = vmatpush.bf16.msra.mxu0 0
        %1565 = vmatpush.bf16.msra.mxu0 0
        %1566 = vmatpush.bf16.msra.mxu0 0
        %1567 = vmatpush.bf16.msra.mxu0 0
        %1568 = vmatpush.bf16.msra.mxu0 %v1556
        %1569 = vmatmul.bf16.gmra.mxu0 %v1559
        %v1570 = vpop.f32.mrf.mxu0
        %v1571 = vadd.f32 0.0, %v1570
        %v1572 = vpop.f32.mrf.mxu0
        %v1573 = vadd.f32 0.0, %v1572
        %1574 = vdwg.mxu0
        %1575 = vrot.lane.b32.xlu0 %v1319, 126
        %v1576 = vpop.permute.xlu0 %1575
        %1577 = vrot.lane.b32.xlu0 %v1322, 126
        %v1578 = vpop.permute.xlu0 %1577
        %v1581 = vsel %vm651, %v1576, 1.0
        %v1582 = vsel %vm651, %v1578, 1.0
        %1583 = vrot.lane.b32.xlu0 %v1319, 123
        %v1584 = vpop.permute.xlu0 %1583
        %1585 = vrot.lane.b32.xlu0 %v1322, 123
        %v1586 = vpop.permute.xlu0 %1585
        %v1589 = vsel %vm651, 1.0, %v1584
        %v1590 = vsel %vm651, 1.0, %v1586
        %v1592 = vsel %vm664, %v1581, 0
        %v1595 = vsel %vm664, %v1582, 0
        %v1598 = vsel %vm664, %v1589, 0
        %v1601 = vsel %vm664, %v1590, 0
        %1603 = vmatpush.xpose.msra.mxu0 0.0
        %1604 = vmatpush.xpose.msra.mxu0 0.0
        %1605 = vmatpush.xpose.msra.mxu0 0.0
        %1606 = vmatpush.xpose.msra.mxu0 0.0
        %1607 = vmatpush.xpose.msra.mxu0 0.0
        %1608 = vmatpush.xpose.msra.mxu0 0.0
        %1609 = vmatpush.xpose.msra.mxu0 0.0
        %1610 = vmatpush.xpose.msra.mxu0 0.0
        %1611 = vmatpush.xpose.msra.mxu0 0.0
        %1612 = vmatpush.xpose.msra.mxu0 0.0
        %1613 = vmatpush.xpose.msra.mxu0 0.0
        %1614 = vmatpush.xpose.msra.mxu0 0.0
        %1615 = vmatpush.xpose.msra.mxu0 0.0
        %1616 = vmatpush.xpose.msra.mxu0 0.0
        %1617 = vmatpush.xpose.msra.mxu0 %v1601
        %1618 = vmatpush.xpose.msra.mxu0 %v1598
        %1619 = vmatmul.f32.gmra.mxu0 %v1592
        %v1620 = vpop.f32.mrf.mxu0
        %v1621 = vadd.f32 0.0, %v1620
        %1622 = vmatmul.f32.gmra.mxu0 %v1595
        %v1623 = vpop.f32.mrf.mxu0
        %v1624 = vadd.f32 0.0, %v1623
        %1625 = vdwg.mxu0
        %vm1626 = vcmp.ge.f32.partialorder %v1621, 0.0
        %vm1627 = vcmp.ge.f32.partialorder %v1624, 0.0
        %v1628 = vmul.f32 %v1621, 0.2
        %v1629 = vmul.f32 %v1624, 0.2
        %v1630 = vsel %vm1626, %v1621, %v1628
        %v1631 = vsel %vm1627, %v1624, %v1629
        %v1632 = vadd.f32 %v1630, %v595
        %v1633 = vadd.f32 %v1631, %v596
        %v1634 = vsel %vm708, %v1632, -inf
        %1635 = vmax.xlane.f32.xlu0 %v1634
        %v1636 = vpop.xlane.xlu0 %1635
        %v1637 = vsel %vm708, %v1633, -inf
        %1638 = vmax.xlane.f32.xlu0 %v1637
        %v1639 = vpop.xlane.xlu0 %1638
        %v1640 = vsub.f32 %v1632, %v1636
        %v1641 = vsub.f32 %v1633, %v1639
        %v1642 = vmul.f32 %v1640, 1.442695
        %v1643 = vpow.pop %v1642
        %v1644 = vmul.f32 %v1641, 1.442695
        %v1645 = vpow.pop %v1644
        %v1646 = vsel %vm708, %v1643, 0.0
        %1647 = vadd.xlane.f32.xlu0 %v1646
        %v1648 = vpop.xlane.xlu0 %1647
        %v1649 = vsel %vm708, %v1645, 0.0
        %1650 = vadd.xlane.f32.xlu0 %v1649
        %v1651 = vpop.xlane.xlu0 %1650
        %v1652 = vrcp.pop %v1648
        %v1653 = vmul.f32 %v1648, %v1652
        %v1654 = vsub.f32 1.0, %v1653
        %v1655 = vmul.f32 %v1652, %v1654
        %v1656 = vadd.f32 %v1652, %v1655
        %vm1657 = vweird.f32 %v1648
        %vm1658 = vweird.f32 %v1652
        %vm1659 = vmor %vm1657, %vm1658
        %v1660 = vsel %vm1659, %v1652, %v1656
        %v1661 = vand.u32 2147483647, %v1648
        %vm1662 = vcmp.eq.f32.partialorder %v1661, 8.507059e+37
        %v1663 = vand.u32 %v1648, 2147483648
        %v1664 = vor.u32 1.1754944e-38, %v1663
        %v1665 = vsel %vm1662, %v1664, %v1660
        %v1666 = vrcp.pop %v1651
        %v1667 = vmul.f32 %v1651, %v1666
        %v1668 = vsub.f32 1.0, %v1667
        %v1669 = vmul.f32 %v1666, %v1668
        %v1670 = vadd.f32 %v1666, %v1669
        %vm1671 = vweird.f32 %v1651
        %vm1672 = vweird.f32 %v1666
        %vm1673 = vmor %vm1671, %vm1672
        %v1674 = vsel %vm1673, %v1666, %v1670
        %v1675 = vand.u32 2147483647, %v1651
        %vm1676 = vcmp.eq.f32.partialorder %v1675, 8.507059e+37
        %v1677 = vand.u32 %v1651, 2147483648
        %v1678 = vor.u32 1.1754944e-38, %v1677
        %v1679 = vsel %vm1676, %v1678, %v1674
        %v1680 = vmul.f32 %v1643, %v1665
        %v1681 = vmul.f32 %v1645, %v1679
        %v1682 = vpack.c.bf16 %v1681, %v1680
        %1683 = vrot.lane.b32.xlu0 %v1428, 64
        %v1684 = vpop.permute.xlu0 %1683
        %v1687 = vsel %vm708, %v1682, 0
        %1689 = vmatpush.bf16.msra.mxu0 0
        %1690 = vmatpush.bf16.msra.mxu0 0
        %1691 = vmatpush.bf16.msra.mxu0 0
        %1692 = vmatpush.bf16.msra.mxu0 0
        %1693 = vmatpush.bf16.msra.mxu0 0
        %1694 = vmatpush.bf16.msra.mxu0 0
        %1695 = vmatpush.bf16.msra.mxu0 0
        %1696 = vmatpush.bf16.msra.mxu0 %v1684
        %1697 = vmatmul.bf16.gmra.mxu0 %v1687
        %v1698 = vpop.f32.mrf.mxu0
        %v1699 = vadd.f32 0.0, %v1698
        %v1700 = vpop.f32.mrf.mxu0
        %v1701 = vadd.f32 0.0, %v1700
        %1702 = vdwg.mxu0
        %v1703 = vsel %vm651, %v1329, 1.0
        %v1704 = vsel %vm651, %v1331, 1.0
        %1705 = vrot.lane.b32.xlu0 %v1319, 122
        %v1706 = vpop.permute.xlu0 %1705
        %1707 = vrot.lane.b32.xlu0 %v1322, 122
        %v1708 = vpop.permute.xlu0 %1707
        %v1711 = vsel %vm651, 1.0, %v1706
        %v1712 = vsel %vm651, 1.0, %v1708
        %v1714 = vsel %vm664, %v1703, 0
        %v1717 = vsel %vm664, %v1704, 0
        %v1720 = vsel %vm664, %v1711, 0
        %v1723 = vsel %vm664, %v1712, 0
        %1725 = vmatpush.xpose.msra.mxu0 0.0
        %1726 = vmatpush.xpose.msra.mxu0 0.0
        %1727 = vmatpush.xpose.msra.mxu0 0.0
        %1728 = vmatpush.xpose.msra.mxu0 0.0
        %1729 = vmatpush.xpose.msra.mxu0 0.0
        %1730 = vmatpush.xpose.msra.mxu0 0.0
        %1731 = vmatpush.xpose.msra.mxu0 0.0
        %1732 = vmatpush.xpose.msra.mxu0 0.0
        %1733 = vmatpush.xpose.msra.mxu0 0.0
        %1734 = vmatpush.xpose.msra.mxu0 0.0
        %1735 = vmatpush.xpose.msra.mxu0 0.0
        %1736 = vmatpush.xpose.msra.mxu0 0.0
        %1737 = vmatpush.xpose.msra.mxu0 0.0
        %1738 = vmatpush.xpose.msra.mxu0 0.0
        %1739 = vmatpush.xpose.msra.mxu0 %v1723
        %1740 = vmatpush.xpose.msra.mxu0 %v1720
        %1741 = vmatmul.f32.gmra.mxu0 %v1714
        %v1742 = vpop.f32.mrf.mxu0
        %v1743 = vadd.f32 0.0, %v1742
        %1744 = vmatmul.f32.gmra.mxu0 %v1717
        %v1745 = vpop.f32.mrf.mxu0
        %v1746 = vadd.f32 0.0, %v1745
        %1747 = vdwg.mxu0
        %vm1748 = vcmp.ge.f32.partialorder %v1743, 0.0
        %vm1749 = vcmp.ge.f32.partialorder %v1746, 0.0
        %v1750 = vmul.f32 %v1743, 0.2
        %v1751 = vmul.f32 %v1746, 0.2
        %v1752 = vsel %vm1748, %v1743, %v1750
        %v1753 = vsel %vm1749, %v1746, %v1751
        %v1754 = vadd.f32 %v1752, %v595
        %v1755 = vadd.f32 %v1753, %v596
        %v1756 = vsel %vm708, %v1754, -inf
        %1757 = vmax.xlane.f32.xlu0 %v1756
        %v1758 = vpop.xlane.xlu0 %1757
        %v1759 = vsel %vm708, %v1755, -inf
        %1760 = vmax.xlane.f32.xlu0 %v1759
        %v1761 = vpop.xlane.xlu0 %1760
        %v1762 = vsub.f32 %v1754, %v1758
        %v1763 = vsub.f32 %v1755, %v1761
        %v1764 = vmul.f32 %v1762, 1.442695
        %v1765 = vpow.pop %v1764
        %v1766 = vmul.f32 %v1763, 1.442695
        %v1767 = vpow.pop %v1766
        %v1768 = vsel %vm708, %v1765, 0.0
        %1769 = vadd.xlane.f32.xlu0 %v1768
        %v1770 = vpop.xlane.xlu0 %1769
        %v1771 = vsel %vm708, %v1767, 0.0
        %1772 = vadd.xlane.f32.xlu0 %v1771
        %v1773 = vpop.xlane.xlu0 %1772
        %v1774 = vrcp.pop %v1770
        %v1775 = vmul.f32 %v1770, %v1774
        %v1776 = vsub.f32 1.0, %v1775
        %v1777 = vmul.f32 %v1774, %v1776
        %v1778 = vadd.f32 %v1774, %v1777
        %vm1779 = vweird.f32 %v1770
        %vm1780 = vweird.f32 %v1774
        %vm1781 = vmor %vm1779, %vm1780
        %v1782 = vsel %vm1781, %v1774, %v1778
        %v1783 = vand.u32 2147483647, %v1770
        %vm1784 = vcmp.eq.f32.partialorder %v1783, 8.507059e+37
        %v1785 = vand.u32 %v1770, 2147483648
        %v1786 = vor.u32 1.1754944e-38, %v1785
        %v1787 = vsel %vm1784, %v1786, %v1782
        %v1788 = vrcp.pop %v1773
        %v1789 = vmul.f32 %v1773, %v1788
        %v1790 = vsub.f32 1.0, %v1789
        %v1791 = vmul.f32 %v1788, %v1790
        %v1792 = vadd.f32 %v1788, %v1791
        %vm1793 = vweird.f32 %v1773
        %vm1794 = vweird.f32 %v1788
        %vm1795 = vmor %vm1793, %vm1794
        %v1796 = vsel %vm1795, %v1788, %v1792
        %v1797 = vand.u32 2147483647, %v1773
        %vm1798 = vcmp.eq.f32.partialorder %v1797, 8.507059e+37
        %v1799 = vand.u32 %v1773, 2147483648
        %v1800 = vor.u32 1.1754944e-38, %v1799
        %v1801 = vsel %vm1798, %v1800, %v1796
        %v1802 = vmul.f32 %v1765, %v1787
        %v1803 = vmul.f32 %v1767, %v1801
        %v1804 = vpack.c.bf16 %v1803, %v1802
        %1805 = vrot.lane.b32.xlu0 %v1428, 32
        %v1806 = vpop.permute.xlu0 %1805
        %v1809 = vsel %vm708, %v1804, 0
        %1811 = vmatpush.bf16.msra.mxu0 0
        %1812 = vmatpush.bf16.msra.mxu0 0
        %1813 = vmatpush.bf16.msra.mxu0 0
        %1814 = vmatpush.bf16.msra.mxu0 0
        %1815 = vmatpush.bf16.msra.mxu0 0
        %1816 = vmatpush.bf16.msra.mxu0 0
        %1817 = vmatpush.bf16.msra.mxu0 0
        %1818 = vmatpush.bf16.msra.mxu0 %v1806
        %1819 = vmatmul.bf16.gmra.mxu0 %v1809
        %v1820 = vpop.f32.mrf.mxu0
        %v1821 = vadd.f32 0.0, %v1820
        %v1822 = vpop.f32.mrf.mxu0
        %v1823 = vadd.f32 0.0, %v1822
        %1824 = vdwg.mxu0
        %1827 = vrot.lane.b32.xlu0 %v1571, 32
        %v1828 = vpop.permute.xlu0 %1827
        %1829 = vrot.lane.b32.xlu0 %v1573, 32
        %v1830 = vpop.permute.xlu0 %1829
        %1835 = vrot.lane.b32.xlu0 %v1699, 64
        %v1836 = vpop.permute.xlu0 %1835
        %1837 = vrot.lane.b32.xlu0 %v1701, 64
        %v1838 = vpop.permute.xlu0 %1837
        %1843 = vrot.lane.b32.xlu0 %v1821, 96
        %v1844 = vpop.permute.xlu0 %1843
        %1845 = vrot.lane.b32.xlu0 %v1823, 96
        %v1846 = vpop.permute.xlu0 %1845
        %v1849 = vsel %vm1179, %v1442, %v1828
        %v1850 = vsel %vm1179, %v1444, %v1830
        %v1851 = vsel %vm1182, %v1849, %v1836
        %v1852 = vsel %vm1182, %v1850, %v1838
        %v1853 = vsel %vm1185, %v1851, %v1844
        %v1854 = vsel %vm1185, %v1852, %v1846
        %v1855 = vld [vmem:[%s8] sm:$0x1]
        %v1857 = vperm.slane %v1855, 0
        %v1859 = vadd.f32 %v1853, %v1857
        %v1860 = vadd.f32 %v1854, %v1857
        %vm1861 = vcmp.gt.f32.partialorder %v1859, 0.0
        %vm1862 = vcmp.gt.f32.partialorder %v1860, 0.0
        %v1863 = vmin.f32 %v1859, 0.0
        %v1864 = vmin.f32 %v1860, 0.0
        %v1865 = vmul.f32 %v1863, 1.442695
        %v1866 = vpow.pop %v1865
        %v1867 = vmul.f32 %v1864, 1.442695
        %v1868 = vpow.pop %v1867
        %v1869 = vsub.f32 %v1866, 1.0
        %v1870 = vsub.f32 %v1868, 1.0
        %v1871 = vsel %vm1861, %v1859, %v1869
        %v1872 = vsel %vm1862, %v1860, %v1870
        %v1873 = vpack.c.bf16 %v1872, %v1871
        %v1874 = vld [vmem:[#allocation7] sm:$0xf]
        %v1875 = vld [vmem:[#allocation7 + $0x4] sm:$0xf]
        %v1876 = vld [vmem:[#allocation7 + $0x8] sm:$0xf]
        %v1877 = vld [vmem:[#allocation7 + $0xc] sm:$0xf]
        %v1878 = vld [vmem:[#allocation7 + $0x10] sm:$0xf]
        %v1879 = vld [vmem:[#allocation7 + $0x14] sm:$0xf]
        %v1880 = vld [vmem:[#allocation7 + $0x18] sm:$0xf]
        %v1881 = vld [vmem:[#allocation7 + $0x1c] sm:$0xf]
        %v1882 = vld [vmem:[#allocation7 + $0x20] sm:$0xf]
        %v1883 = vld [vmem:[#allocation7 + $0x24] sm:$0xf]
        %v1884 = vld [vmem:[#allocation7 + $0x28] sm:$0xf]
        %v1885 = vld [vmem:[#allocation7 + $0x2c] sm:$0xf]
        %v1886 = vld [vmem:[#allocation7 + $0x30] sm:$0xf]
        %v1887 = vld [vmem:[#allocation7 + $0x34] sm:$0xf]
        %v1888 = vld [vmem:[#allocation7 + $0x38] sm:$0xf]
        %v1889 = vld [vmem:[#allocation7 + $0x3c] sm:$0xf]
        %v1906 = vunpack.c.l.b16 %v1874
        %v1907 = vunpack.c.l.b16 %v1875
        %v1908 = vunpack.c.l.b16 %v1876
        %v1909 = vunpack.c.l.b16 %v1877
        %v1910 = vunpack.c.l.b16 %v1878
        %v1911 = vunpack.c.l.b16 %v1879
        %v1912 = vunpack.c.l.b16 %v1880
        %v1913 = vunpack.c.l.b16 %v1881
        %v1914 = vunpack.c.l.b16 %v1882
        %v1915 = vunpack.c.l.b16 %v1883
        %v1916 = vunpack.c.l.b16 %v1884
        %v1917 = vunpack.c.l.b16 %v1885
        %v1918 = vunpack.c.l.b16 %v1886
        %v1919 = vunpack.c.l.b16 %v1887
        %v1920 = vunpack.c.l.b16 %v1888
        %v1921 = vunpack.c.l.b16 %v1889
        %v1922 = vpack.c.b16 %v1907, %v1906
        %v1923 = vpack.c.b16 %v1909, %v1908
        %v1924 = vpack.c.b16 %v1911, %v1910
        %v1925 = vpack.c.b16 %v1913, %v1912
        %v1926 = vpack.c.b16 %v1915, %v1914
        %v1927 = vpack.c.b16 %v1917, %v1916
        %v1928 = vpack.c.b16 %v1919, %v1918
        %v1929 = vpack.c.b16 %v1921, %v1920
        %1938 = vmatpush.bf16.msra.mxu0 %v1929
        %1939 = vmatpush.bf16.msra.mxu0 %v1928
        %1940 = vmatpush.bf16.msra.mxu0 %v1927
        %1941 = vmatpush.bf16.msra.mxu0 %v1926
        %1942 = vmatpush.bf16.msra.mxu0 %v1925
        %1943 = vmatpush.bf16.msra.mxu0 %v1924
        %1944 = vmatpush.bf16.msra.mxu0 %v1923
        %1945 = vmatpush.bf16.msra.mxu0 %v1922
        %1946 = vmatmul.bf16.gmra.mxu0 %v1873
        %v1947 = vpop.f32.mrf.mxu0
        %v1948 = vadd.f32 0.0, %v1947
        %v1949 = vpop.f32.mrf.mxu0
        %v1950 = vadd.f32 0.0, %v1949
        %1951 = vdwg.mxu0
        %v1952 = vld [vmem:[#allocation8] sm:$0xff]
        %v1953 = vld [vmem:[#allocation8 + $0x8] sm:$0xff]
        %v1954 = vld [vmem:[#allocation8 + $0x10] sm:$0xff]
        %v1955 = vld [vmem:[#allocation8 + $0x18] sm:$0xff]
        %v1956 = vld [vmem:[#allocation8 + $0x20] sm:$0xff]
        %v1957 = vld [vmem:[#allocation8 + $0x28] sm:$0xff]
        %v1958 = vld [vmem:[#allocation8 + $0x30] sm:$0xff]
        %v1959 = vld [vmem:[#allocation8 + $0x38] sm:$0xff]
        %v1960 = vld [vmem:[#allocation8 + $0x40] sm:$0xff]
        %v1961 = vld [vmem:[#allocation8 + $0x48] sm:$0xff]
        %v1962 = vld [vmem:[#allocation8 + $0x50] sm:$0xff]
        %v1963 = vld [vmem:[#allocation8 + $0x58] sm:$0xff]
        %v1964 = vld [vmem:[#allocation8 + $0x60] sm:$0xff]
        %v1965 = vld [vmem:[#allocation8 + $0x68] sm:$0xff]
        %v1966 = vld [vmem:[#allocation8 + $0x70] sm:$0xff]
        %v1967 = vld [vmem:[#allocation8 + $0x78] sm:$0xff]
        %1968 = vmatpush.msra.mxu0 %v1967
        %1969 = vmatpush.msra.mxu0 %v1966
        %1970 = vmatpush.msra.mxu0 %v1965
        %1971 = vmatpush.msra.mxu0 %v1964
        %1972 = vmatpush.msra.mxu0 %v1963
        %1973 = vmatpush.msra.mxu0 %v1962
        %1974 = vmatpush.msra.mxu0 %v1961
        %1975 = vmatpush.msra.mxu0 %v1960
        %1976 = vmatpush.msra.mxu0 %v1959
        %1977 = vmatpush.msra.mxu0 %v1958
        %1978 = vmatpush.msra.mxu0 %v1957
        %1979 = vmatpush.msra.mxu0 %v1956
        %1980 = vmatpush.msra.mxu0 %v1955
        %1981 = vmatpush.msra.mxu0 %v1954
        %1982 = vmatpush.msra.mxu0 %v1953
        %1983 = vmatpush.msra.mxu0 %v1952
        %1984 = vmatmul.f32.gmra.mxu0 %v1871
        %v1985 = vpop.f32.mrf.mxu0
        %v1986 = vadd.f32 0.0, %v1985
        %1987 = vmatmul.f32.gmra.mxu0 %v1872
        %v1988 = vpop.f32.mrf.mxu0
        %v1989 = vadd.f32 0.0, %v1988
        %1990 = vdwg.mxu0
        %v1991 = vsel %vm651, %v1986, 1.0
        %v1992 = vsel %vm651, %v1989, 1.0
        %v1993 = vsel %vm651, 1.0, %v1986
        %v1994 = vsel %vm651, 1.0, %v1989
        %v1996 = vsel %vm664, %v1991, 0
        %v1999 = vsel %vm664, %v1992, 0
        %v2002 = vsel %vm664, %v1993, 0
        %v2005 = vsel %vm664, %v1994, 0
        %2007 = vmatpush.xpose.msra.mxu0 0.0
        %2008 = vmatpush.xpose.msra.mxu0 0.0
        %2009 = vmatpush.xpose.msra.mxu0 0.0
        %2010 = vmatpush.xpose.msra.mxu0 0.0
        %2011 = vmatpush.xpose.msra.mxu0 0.0
        %2012 = vmatpush.xpose.msra.mxu0 0.0
        %2013 = vmatpush.xpose.msra.mxu0 0.0
        %2014 = vmatpush.xpose.msra.mxu0 0.0
        %2015 = vmatpush.xpose.msra.mxu0 0.0
        %2016 = vmatpush.xpose.msra.mxu0 0.0
        %2017 = vmatpush.xpose.msra.mxu0 0.0
        %2018 = vmatpush.xpose.msra.mxu0 0.0
        %2019 = vmatpush.xpose.msra.mxu0 0.0
        %2020 = vmatpush.xpose.msra.mxu0 0.0
        %2021 = vmatpush.xpose.msra.mxu0 %v2005
        %2022 = vmatpush.xpose.msra.mxu0 %v2002
        %2023 = vmatmul.f32.gmra.mxu0 %v1996
        %v2024 = vpop.f32.mrf.mxu0
        %v2025 = vadd.f32 0.0, %v2024
        %2026 = vmatmul.f32.gmra.mxu0 %v1999
        %v2027 = vpop.f32.mrf.mxu0
        %v2028 = vadd.f32 0.0, %v2027
        %2029 = vdwg.mxu0
        %vm2030 = vcmp.ge.f32.partialorder %v2025, 0.0
        %vm2031 = vcmp.ge.f32.partialorder %v2028, 0.0
        %v2032 = vmul.f32 %v2025, 0.2
        %v2033 = vmul.f32 %v2028, 0.2
        %v2034 = vsel %vm2030, %v2025, %v2032
        %v2035 = vsel %vm2031, %v2028, %v2033
        %v2036 = vadd.f32 %v2034, %v595
        %v2037 = vadd.f32 %v2035, %v596
        %v2038 = vsel %vm708, %v2036, -inf
        %2039 = vmax.xlane.f32.xlu0 %v2038
        %v2040 = vpop.xlane.xlu0 %2039
        %v2041 = vsel %vm708, %v2037, -inf
        %2042 = vmax.xlane.f32.xlu0 %v2041
        %v2043 = vpop.xlane.xlu0 %2042
        %v2044 = vsub.f32 %v2036, %v2040
        %v2045 = vsub.f32 %v2037, %v2043
        %v2046 = vmul.f32 %v2044, 1.442695
        %v2047 = vpow.pop %v2046
        %v2048 = vmul.f32 %v2045, 1.442695
        %v2049 = vpow.pop %v2048
        %v2050 = vsel %vm708, %v2047, 0.0
        %2051 = vadd.xlane.f32.xlu0 %v2050
        %v2052 = vpop.xlane.xlu0 %2051
        %v2053 = vsel %vm708, %v2049, 0.0
        %2054 = vadd.xlane.f32.xlu0 %v2053
        %v2055 = vpop.xlane.xlu0 %2054
        %v2056 = vrcp.pop %v2052
        %v2057 = vmul.f32 %v2052, %v2056
        %v2058 = vsub.f32 1.0, %v2057
        %v2059 = vmul.f32 %v2056, %v2058
        %v2060 = vadd.f32 %v2056, %v2059
        %vm2061 = vweird.f32 %v2052
        %vm2062 = vweird.f32 %v2056
        %vm2063 = vmor %vm2061, %vm2062
        %v2064 = vsel %vm2063, %v2056, %v2060
        %v2065 = vand.u32 2147483647, %v2052
        %vm2066 = vcmp.eq.f32.partialorder %v2065, 8.507059e+37
        %v2067 = vand.u32 %v2052, 2147483648
        %v2068 = vor.u32 1.1754944e-38, %v2067
        %v2069 = vsel %vm2066, %v2068, %v2064
        %v2070 = vrcp.pop %v2055
        %v2071 = vmul.f32 %v2055, %v2070
        %v2072 = vsub.f32 1.0, %v2071
        %v2073 = vmul.f32 %v2070, %v2072
        %v2074 = vadd.f32 %v2070, %v2073
        %vm2075 = vweird.f32 %v2055
        %vm2076 = vweird.f32 %v2070
        %vm2077 = vmor %vm2075, %vm2076
        %v2078 = vsel %vm2077, %v2070, %v2074
        %v2079 = vand.u32 2147483647, %v2055
        %vm2080 = vcmp.eq.f32.partialorder %v2079, 8.507059e+37
        %v2081 = vand.u32 %v2055, 2147483648
        %v2082 = vor.u32 1.1754944e-38, %v2081
        %v2083 = vsel %vm2080, %v2082, %v2078
        %v2084 = vmul.f32 %v2047, %v2069
        %v2085 = vmul.f32 %v2049, %v2083
        %v2086 = vpack.c.bf16 %v2085, %v2084
        %v2087 = vpack.c.bf16 %v1950, %v1948
        %v2088 = vld [vmem:[%s11] sm:$0x1]
        %v2090 = vperm.slane %v2088, 0
        %v2093 = vsel %vm708, %v2086, 0
        %2095 = vmatpush.bf16.msra.mxu0 0
        %2096 = vmatpush.bf16.msra.mxu0 0
        %2097 = vmatpush.bf16.msra.mxu0 0
        %2098 = vmatpush.bf16.msra.mxu0 0
        %2099 = vmatpush.bf16.msra.mxu0 0
        %2100 = vmatpush.bf16.msra.mxu0 0
        %2101 = vmatpush.bf16.msra.mxu0 0
        %2102 = vmatpush.bf16.msra.mxu0 %v2087
        %2103 = vmatmul.bf16.gmra.mxu0 %v2093
        %v2104 = vpop.f32.mrf.mxu0
        %v2105 = vadd.f32 %v2090, %v2104
        %v2106 = vpop.f32.mrf.mxu0
        %v2107 = vadd.f32 %v2090, %v2106
        %2108 = vdwg.mxu0
        %v2109 = vld [vmem:[%s583] sm:$0x3]
        %v2111 = vsel %vm708, %v2109, 0
        %2113 = vmatpush.msra.mxu0 0.0
        %2114 = vmatpush.msra.mxu0 0.0
        %2115 = vmatpush.msra.mxu0 0.0
        %2116 = vmatpush.msra.mxu0 0.0
        %2117 = vmatpush.msra.mxu0 0.0
        %2118 = vmatpush.msra.mxu0 0.0
        %2119 = vmatpush.msra.mxu0 0.0
        %2120 = vmatpush.msra.mxu0 0.0
        %2121 = vmatpush.msra.mxu0 0.0
        %2122 = vmatpush.msra.mxu0 0.0
        %2123 = vmatpush.msra.mxu0 0.0
        %2124 = vmatpush.msra.mxu0 0.0
        %2125 = vmatpush.msra.mxu0 0.0
        %2126 = vmatpush.msra.mxu0 0.0
        %2127 = vmatpush.msra.mxu0 %v2107
        %2128 = vmatpush.msra.mxu0 %v2105
        %2129 = vmatmul.f32.gmra.mxu0 %v2111
        %v2130 = vpop.f32.mrf.mxu0
        %v2131 = vadd.f32 0.0, %v2130
        %2132 = vdwg.mxu0
        %v2133 = vld [vmem:[#allocation10] sm:$0xff]
        %v2134 = vld [vmem:[#allocation10 + $0x8] sm:$0xff]
        %v2135 = vld [vmem:[#allocation10 + $0x10] sm:$0xff]
        %v2136 = vld [vmem:[#allocation10 + $0x18] sm:$0xff]
        %v2137 = vld [vmem:[#allocation2] sm:$0x1]
        %v2139 = vperm.slane %v2137, 0
        %v2142 = vsel %vm1179, %v2131, 0
        %2144 = vmatpush.msra.mxu0 0.0
        %2145 = vmatpush.msra.mxu0 0.0
        %2146 = vmatpush.msra.mxu0 0.0
        %2147 = vmatpush.msra.mxu0 0.0
        %2148 = vmatpush.msra.mxu0 0.0
        %2149 = vmatpush.msra.mxu0 0.0
        %2150 = vmatpush.msra.mxu0 0.0
        %2151 = vmatpush.msra.mxu0 0.0
        %2152 = vmatpush.msra.mxu0 0.0
        %2153 = vmatpush.msra.mxu0 0.0
        %2154 = vmatpush.msra.mxu0 0.0
        %2155 = vmatpush.msra.mxu0 0.0
        %2156 = vmatpush.msra.mxu0 %v2136
        %2157 = vmatpush.msra.mxu0 %v2135
        %2158 = vmatpush.msra.mxu0 %v2134
        %2159 = vmatpush.msra.mxu0 %v2133
        %2160 = vmatmul.f32.gmra.mxu0 %v2142
        %v2161 = vpop.f32.mrf.mxu0
        %v2162 = vadd.f32 %v2139, %v2161
        %2163 = vdwg.mxu0
        %vm2164 = vcmask 1024
        %2165 = vst.msk [vmem:[%s587] sm:$0x3] %vm2164, %v2162
        %p2166 = scmp.lt.s32.totalorder %s30, 1
        %s2167 = scalar_select %p2166, %s30, 1
        %s2168 = smul.addr %s2167, 2
        %s2169 = scalar_lea.vmem %s14, %s2168
        // Predicated region
        $region97: #{forward.1} parent=75 // pred_check
          %p2170 = pneg %p357
        $region98: #{forward.1} parent=75 // pred_check_branch
          %2172 = sbr.rel (%p2170) target = $region100
        $region99: #{forward.1} parent=75 // pred_region
          _
        $region100: #{forward.1} parent=75 // pred_fallthru
          _
      $region76: #{forward.1} parent=5 // pred_fallthru
        _
      %p2173 = scmp.le.s32.totalorder 2, %s25
      // Predicated region
      $region101: #{forward.1} parent=5 // pred_check
        %p2174 = pneg %p2173
      $region102: #{forward.1} parent=5 // pred_check_branch
        %2176 = sbr.rel (%p2174) target = $region104
      $region103: #{forward.1} parent=5 // pred_region
        %s2177 = ssub.s32 %s25, 2
        // Predicated region
        $region105: #{forward.1} parent=103 // pred_check
          %p2178 = pneg %p363
        $region106: #{forward.1} parent=103 // pred_check_branch
          %2180 = sbr.rel (%p2178) target = $region108
        $region107: #{forward.1} parent=103 // pred_region
          %p2181 = scmp.lt.s32.totalorder %s31, 1
          %s2182 = scalar_select %p2181, %s31, 1
          %s2183 = smul.addr %s2182, 2
          %s2184 = scalar_lea.vmem %s14, %s2183
        $region108: #{forward.1} parent=103 // pred_fallthru
          _
      $region104: #{forward.1} parent=5 // pred_fallthru
        _
    $region6: #{forward.1} parent=1 // loop_footer
      %s29 = sadd.s32 1, %s25
    $region7: #{forward.1} parent=1 // loop_footer_branch
      %24 = sbr.rel target = $region3
    $region8: #{forward.1} parent=1 // loop_exit
      _
    %2185 = vsyncpa [#allocation4], 1
    %s2186 = scalar_lea.sflag [#allocation4], 1
    %2187 = vsyncpa %s2186, 1
    %2188 = vsyncpa [#allocation6], 1
    %2189 = vsyncpa [#allocation9], 1

</llo_original>
